<compile_context>
chip_gen: v7x
topology: tpu7x:2x2x1
jax: 0.10.0
libtpu: 0.0.40
codegen_flags: <defaults>
</compile_context>

<pallas_src>
import numpy as np
import jax
import jax.numpy as jnp
from jax.experimental import pallas as pl
from jax.experimental.pallas import tpu as pltpu


# --------------------------- fused Pallas kernel -----------------------------

def _actor_fused_kernel(
    a_ref, x_ref, p_ref, seg_ref, segt_ref,
    w1c_ref, b1c_ref, w2c_ref, b2c_ref,
    waf0_ref, baf0_ref, wgh0_ref, wgg0_ref, bg0_ref,
    waf1_ref, baf1_ref, wgh1_ref, wgg1_ref, bg1_ref,
    waf2_ref, baf2_ref, wgh2_ref, wgg2_ref, bg2_ref,
    w1x_ref, w1g_ref, b1o_ref, w2o_ref, b2o_ref,
    o_ref,
):
    f32 = jnp.float32
    bf16 = jnp.bfloat16

    def wmm(lhs, rhs):
        # weight / aggregation matmuls: bf16 operands (native MXU rate), f32 acc
        return jnp.dot(lhs.astype(bf16), rhs.astype(bf16),
                       preferred_element_type=f32)

    def smm(lhs, rhs):
        # 0/1 selection / segment matmuls (gather, masked sum, repeat): exact f32
        return jnp.dot(lhs, rhs, preferred_element_type=f32)

    a = a_ref[...]          # (V, V)   normalized adjacency
    x = x_ref[...]          # (V, Din) node features
    p = p_ref[...]          # (BNp, V) pad_and_pack / host-select one-hot matrix
    seg = seg_ref[...]      # (B, BNp) per-graph valid-row indicator
    segt = segt_ref[...]    # (BNp, B) transpose (repeat_interleave matrix)

    def attention(z, g, waf, baf, wgh, wgg, bg):
        # SimpleSelfAttention: softmax over the feature axis, mask via `seg`.
        h = wgh.shape[0]
        zaf = wmm(z, waf) + baf                          # (BNp, 2h), f32
        logits = zaf[:, :h]
        feat = zaf[:, h:]
        m = jnp.max(logits, axis=-1, keepdims=True)
        e = jnp.exp(logits - m)
        att = e * pl.reciprocal(jnp.sum(e, axis=-1, keepdims=True), approx=True)
        # (att * mask * feat).sum over nodes == seg @ (att * feat): padded rows
        # are excluded because their seg entry is 0.
        pooled = smm(seg, att * feat)                    # (B, h)
        g_ = wmm(pooled, wgh) + wmm(g, wgg) + bg         # (B, G)
        return g + g_

    # ---- g0 attention on raw (padded) host features -------------------------
    z0 = smm(p, x)                                       # (BNp, Din)
    g = jnp.zeros((seg.shape[0], wgg0_ref.shape[0]), f32)
    g = attention(z0, g, waf0_ref[...], baf0_ref[...], wgh0_ref[...],
                  wgg0_ref[...], bg0_ref[...])

    # ---- conv1 + relu:  relu(A_norm @ (X @ W1) + b1) -------------------------
    # TODO(synk): for large V, tile this (rows parallel / K arbitrary) or use a
    # CSR neighbor gather instead of the dense V x V adjacency.
    x1 = jnp.maximum(wmm(a, wmm(x, w1c_ref[...])) + b1c_ref[...], 0.0)
    z1 = smm(p, x1)
    g = attention(z1, g, waf1_ref[...], baf1_ref[...], wgh1_ref[...],
                  wgg1_ref[...], bg1_ref[...])

    # ---- conv2 + relu --------------------------------------------------------
    x2 = jnp.maximum(wmm(a, wmm(x1, w2c_ref[...])) + b2c_ref[...], 0.0)
    z2 = smm(p, x2)
    g = attention(z2, g, waf2_ref[...], baf2_ref[...], wgh2_ref[...],
                  wgg2_ref[...], bg2_ref[...])

    # ---- output head: relu([x2[hosts] | g_rep] @ W1 + b1) @ W2 + b2 ----------
    # W1 is pre-split into an x-part and a g-part, so no concat is needed.
    g_rep = smm(segt, g)                                 # (BNp, G) repeat_interleave
    h1 = jnp.maximum(wmm(z2, w1x_ref[...]) + wmm(g_rep, w1g_ref[...])
                     + b1o_ref[...], 0.0)
    act = wmm(h1, w2o_ref[...]) + b2o_ref[...]           # (BNp, Apad) lane-dense

    valid = jnp.sum(segt, axis=-1, keepdims=True)        # (BNp, 1): 1.0 for real rows
    o_ref[...] = jnp.where(valid > 0.5, act, -jnp.inf)


# ------------------------------ kernel wrapper --------------------------------

def _fused_forward_padded(a, x, p, seg, segt, weights):
    BNp = p.shape[0]
    V, Din = x.shape
    B = seg.shape[0]
    H1 = weights[0].shape[1]          # w1c
    H2 = weights[2].shape[1]          # w2c
    G = weights[7].shape[0]           # wgg0 is (G, G)
    Apad = weights[-1].shape[1]       # padded action head width

    args = (a, x, p, seg, segt) + tuple(weights)

    def mmf(m, k, n):
        return 2 * m * k * n

    flops = (
        mmf(V, Din, H1) + mmf(V, V, H1)                     # conv1
        + mmf(V, H1, H2) + mmf(V, V, H2)                    # conv2
        + mmf(BNp, V, Din + H1 + H2)                        # host gathers
        + mmf(BNp, Din, 2 * H1) + mmf(BNp, H1, 2 * H1)      # attn projections
        + mmf(BNp, H2, 2 * H2)
        + mmf(B, BNp, 2 * H1 + H2)                          # segment sums
        + 2 * mmf(B, H1, G) + mmf(B, H2, G) + 3 * mmf(B, G, G)
        + mmf(BNp, B, G)                                    # repeat_interleave
        + mmf(BNp, H2 + G, H1) + mmf(BNp, H1, Apad)         # output head
    )
    transcendentals = BNp * (2 * H1 + H2) + 3 * BNp
    bytes_accessed = sum(int(t.size) * t.dtype.itemsize for t in args)
    bytes_accessed += BNp * Apad * 4

    return pl.pallas_call(
        _actor_fused_kernel,
        out_shape=jax.ShapeDtypeStruct((BNp, Apad), jnp.float32),
        in_specs=[pl.BlockSpec(memory_space=pltpu.MemorySpace.VMEM)] * len(args),
        out_specs=pl.BlockSpec(memory_space=pltpu.MemorySpace.VMEM),
        cost_estimate=pl.CostEstimate(flops=int(flops),
                                      transcendentals=int(transcendentals),
                                      bytes_accessed=int(bytes_accessed)),
    )(*args)


def make_forward(params, topo):
    """Builds a jitted x -> logits function; all indices precomputed once."""
    weights = params['flat']
    B, N, BN = topo['B'], topo['N'], topo['BN']
    A = params['action_space']

    @jax.jit
    def fwd(x, a, p, seg, segt, *w):
        out_pad = _fused_forward_padded(a, x, p, seg, segt, w)  # (BNp, Apad)
        return out_pad[:BN, :A].reshape(B, N * A)

    def run(x):
        return fwd(x, topo['a'], topo['p'], topo['seg'], topo['segt'], *weights)

    return run


# ------------------------ one-time host-side preprocessing --------------------

def build_gcn_adj(ei, num_nodes):
    """Dense D^{-1/2}(A+I)D^{-1/2} from a 2x|E| edge index (GCNConv norm)."""
    src, tgt = np.asarray(ei)
    M = np.zeros((num_nodes, num_nodes), np.float32)
    M[tgt, src] = 1.0
    idx = np.arange(num_nodes)
    M[idx, idx] = 1.0
    deg = M.sum(axis=1)
    dinv = 1.0 / np.sqrt(np.maximum(deg, 1e-12))
    return (dinv[:, None] * M * dinv[None, :]).astype(np.float32)


def prepare_topology(x_np, ei, batches):
    """Precompute host selection / pad_and_pack / repeat matrices (once)."""
    x_np = np.asarray(x_np)
    V = x_np.shape[0]
    hosts = np.where(x_np[:, 0] == 1.0)[0]
    batches = np.asarray(batches)
    sizes = batches[1:] - batches[:-1]
    B = len(sizes)
    N = int(sizes.max())
    BN = B * N
    BNp = ((BN + 7) // 8) * 8           # sublane-pad rows so output tile is dense

    P = np.zeros((BNp, V), np.float32)      # pad_and_pack as a one-hot gather
    seg = np.zeros((B, BNp), np.float32)    # per-graph valid-row indicator
    for b in range(B):
        st, en = int(batches[b]), int(batches[b + 1])
        for n in range(en - st):
            P[b * N + n, hosts[st + n]] = 1.0
            seg[b, b * N + n] = 1.0

    return dict(
        a=jnp.asarray(build_gcn_adj(ei, V)),
        p=jnp.asarray(P),
        seg=jnp.asarray(seg),
        segt=jnp.asarray(seg.T.copy()),
        B=B, N=N, BN=BN, BNp=BNp,
    )


# ------------------------------ parameter init --------------------------------

def init_linear(key, din, dout):
    k1, k2 = jax.random.split(key)
    bound = 1.0 / np.sqrt(din)
    w = jax.random.uniform(k1, (din, dout), jnp.float32, -bound, bound)
    b = jax.random.uniform(k2, (1, dout), jnp.float32, -bound, bound)
    return w, b


def init_attn(key, in_dim, h_dim, g_dim):
    k1, k2, k3 = jax.random.split(key, 3)
    wa, ba = init_linear(k1, in_dim, h_dim)
    wf, bf = init_linear(k2, in_dim, h_dim)
    wg, bg = init_linear(k3, h_dim + g_dim, g_dim)
    # fuse att + feat projections into one matmul; split glb to avoid concat
    waf = jnp.concatenate([wa, wf], axis=1)
    baf = jnp.concatenate([ba, bf], axis=1)
    return [waf, baf, wg[:h_dim], wg[h_dim:], bg]


def init_params(key, in_dim, hidden1, hidden2, action_space, a_pad=128):
    gdim = hidden1
    ks = jax.random.split(key, 7)
    w1c, b1c = init_linear(ks[0], in_dim, hidden1)
    w2c, b2c = init_linear(ks[1], hidden1, hidden2)
    g0 = init_attn(ks[2], in_dim, hidden1, gdim)
    g1 = init_attn(ks[3], hidden1, hidden1, gdim)
    g2 = init_attn(ks[4], hidden2, hidden2, gdim)
    w1o, b1o = init_linear(ks[5], hidden2 + gdim, hidden1)
    w2o, b2o = init_linear(ks[6], hidden1, action_space)
    # lane-dense (128-padded) action head: extra columns are zero, sliced off later
    w2p = jnp.zeros((hidden1, a_pad), jnp.float32).at[:, :action_space].set(w2o)
    b2p = jnp.zeros((1, a_pad), jnp.float32).at[:, :action_space].set(b2o)
    flat = [w1c, b1c, w2c, b2c, *g0, *g1, *g2,
            w1o[:hidden2], w1o[hidden2:], b1o, w2p, b2p]
    return {'flat': flat, 'action_space': action_space, 'gdim': gdim}


# ------------------------------------ main -------------------------------------

if __name__ == "__main__":
    IN_DIM, H1, H2, A_SPACE = 8, 32, 16, 11
    key = jax.random.PRNGKey(0)
    kp, kx = jax.random.split(key)
    params = init_params(kp, IN_DIM, H1, H2, A_SPACE)

    # 12 nodes, 2 graphs (nodes 0-5 and 6-11); hosts have x[:, 0] == 1
    V = 12
    x = jax.random.normal(kx, (V, IN_DIM), jnp.float32)
    host_nodes = np.array([0, 1, 2, 6, 7])
    col0 = np.zeros((V,), np.float32)
    col0[host_nodes] = 1.0
    x = x.at[:, 0].set(jnp.asarray(col0))

    src = np.array([0, 1, 2, 3, 4, 5, 1, 2, 3, 4, 5, 0,
                    6, 7, 8, 9, 10, 11, 7, 8, 9, 10, 11, 6])
    tgt = np.array([1, 2, 3, 4, 5, 0, 0, 1, 2, 3, 4, 5,
                    7, 8, 9, 10, 11, 6, 6, 7, 8, 9, 10, 11])
    ei = np.stack([src, tgt]).astype(np.int32)
    batches = np.array([0, 3, 5], dtype=np.int64)   # 3 hosts in graph 0, 2 in graph 1

    # One-time, host-side topology preprocessing (kept out of the jitted hot path).
    topo = prepare_topology(np.asarray(x), ei, batches)
    forward = make_forward(params, topo)

    # TODO(synk): torch.distributions.Categorical has no Pallas equivalent;
    # returning the masked logits (padded slots are -inf).
    logits = forward(x)
    jax.block_until_ready(logits)

    assert logits.shape == (2, 3 * A_SPACE)
    assert bool(jnp.all(jnp.isfinite(logits[0])))                 # graph 0 fully valid
    assert bool(jnp.all(jnp.isfinite(logits[1, :2 * A_SPACE])))   # graph 1 real nodes
    assert bool(jnp.all(jnp.isinf(logits[1, 2 * A_SPACE:])))      # graph 1 padded -> -inf
    print("KERNEL_OK")
</pallas_src>

<mosaic_0001>
module attributes {stable_mosaic.version = 11 : i64} {
  func.func @_actor_fused_kernel(%arg0: memref<12x12xf32, #tpu.memory_space<vmem>>, %arg1: memref<12x8xf32, #tpu.memory_space<vmem>>, %arg2: memref<8x12xf32, #tpu.memory_space<vmem>>, %arg3: memref<2x8xf32, #tpu.memory_space<vmem>>, %arg4: memref<8x2xf32, #tpu.memory_space<vmem>>, %arg5: memref<8x32xf32, #tpu.memory_space<vmem>>, %arg6: memref<1x32xf32, #tpu.memory_space<vmem>>, %arg7: memref<32x16xf32, #tpu.memory_space<vmem>>, %arg8: memref<1x16xf32, #tpu.memory_space<vmem>>, %arg9: memref<8x64xf32, #tpu.memory_space<vmem>>, %arg10: memref<1x64xf32, #tpu.memory_space<vmem>>, %arg11: memref<32x32xf32, #tpu.memory_space<vmem>>, %arg12: memref<32x32xf32, #tpu.memory_space<vmem>>, %arg13: memref<1x32xf32, #tpu.memory_space<vmem>>, %arg14: memref<32x64xf32, #tpu.memory_space<vmem>>, %arg15: memref<1x64xf32, #tpu.memory_space<vmem>>, %arg16: memref<32x32xf32, #tpu.memory_space<vmem>>, %arg17: memref<32x32xf32, #tpu.memory_space<vmem>>, %arg18: memref<1x32xf32, #tpu.memory_space<vmem>>, %arg19: memref<16x32xf32, #tpu.memory_space<vmem>>, %arg20: memref<1x32xf32, #tpu.memory_space<vmem>>, %arg21: memref<16x32xf32, #tpu.memory_space<vmem>>, %arg22: memref<32x32xf32, #tpu.memory_space<vmem>>, %arg23: memref<1x32xf32, #tpu.memory_space<vmem>>, %arg24: memref<16x32xf32, #tpu.memory_space<vmem>>, %arg25: memref<32x32xf32, #tpu.memory_space<vmem>>, %arg26: memref<1x32xf32, #tpu.memory_space<vmem>>, %arg27: memref<32x128xf32, #tpu.memory_space<vmem>>, %arg28: memref<1x128xf32, #tpu.memory_space<vmem>>, %arg29: memref<8x128xf32, #tpu.memory_space<vmem>>) attributes {dimension_semantics = [], scalar_prefetch = 0 : i64, scratch_operands = 0 : i64, tpu.core_type = #tpu.core_type<tc>} {
    %c0 = arith.constant 0 : index
    %c0_0 = arith.constant 0 : index
    %0 = vector.load %arg0[%c0, %c0_0] : memref<12x12xf32, #tpu.memory_space<vmem>>, vector<12x12xf32>
    %c0_1 = arith.constant 0 : index
    %c0_2 = arith.constant 0 : index
    %1 = vector.load %arg1[%c0_1, %c0_2] : memref<12x8xf32, #tpu.memory_space<vmem>>, vector<12x8xf32>
    %c0_3 = arith.constant 0 : index
    %c0_4 = arith.constant 0 : index
    %2 = vector.load %arg2[%c0_3, %c0_4] : memref<8x12xf32, #tpu.memory_space<vmem>>, vector<8x12xf32>
    %c0_5 = arith.constant 0 : index
    %c0_6 = arith.constant 0 : index
    %3 = vector.load %arg3[%c0_5, %c0_6] : memref<2x8xf32, #tpu.memory_space<vmem>>, vector<2x8xf32>
    %c0_7 = arith.constant 0 : index
    %c0_8 = arith.constant 0 : index
    %4 = vector.load %arg4[%c0_7, %c0_8] : memref<8x2xf32, #tpu.memory_space<vmem>>, vector<8x2xf32>
    %cst = arith.constant dense<0.000000e+00> : vector<8x8xf32>
    %5 = tpu.matmul %2, %1, %cst {dimension_numbers = #tpu.dot_dimension_numbers<[1], [0], [0], [1], [0, 0, 1, 1], [], []>} : vector<8x12xf32>, vector<12x8xf32>, vector<8x8xf32> -> vector<8x8xf32>
    %cst_9 = arith.constant 0.000000e+00 : f32
    %6 = vector.broadcast %cst_9 : f32 to vector<2x32xf32>
    %c0_10 = arith.constant 0 : index
    %c0_11 = arith.constant 0 : index
    %7 = vector.load %arg9[%c0_10, %c0_11] : memref<8x64xf32, #tpu.memory_space<vmem>>, vector<8x64xf32>
    %c0_12 = arith.constant 0 : index
    %c0_13 = arith.constant 0 : index
    %8 = vector.load %arg10[%c0_12, %c0_13] : memref<1x64xf32, #tpu.memory_space<vmem>>, vector<1x64xf32>
    %c0_14 = arith.constant 0 : index
    %c0_15 = arith.constant 0 : index
    %9 = vector.load %arg11[%c0_14, %c0_15] : memref<32x32xf32, #tpu.memory_space<vmem>>, vector<32x32xf32>
    %c0_16 = arith.constant 0 : index
    %c0_17 = arith.constant 0 : index
    %10 = vector.load %arg12[%c0_16, %c0_17] : memref<32x32xf32, #tpu.memory_space<vmem>>, vector<32x32xf32>
    %c0_18 = arith.constant 0 : index
    %c0_19 = arith.constant 0 : index
    %11 = vector.load %arg13[%c0_18, %c0_19] : memref<1x32xf32, #tpu.memory_space<vmem>>, vector<1x32xf32>
    %12 = arith.truncf %5 : vector<8x8xf32> to vector<8x8xbf16>
    %13 = arith.truncf %7 : vector<8x64xf32> to vector<8x64xbf16>
    %cst_20 = arith.constant dense<0.000000e+00> : vector<8x64xf32>
    %14 = tpu.matmul %12, %13, %cst_20 {dimension_numbers = #tpu.dot_dimension_numbers<[1], [0], [0], [1], [0, 0, 1, 1], [], []>} : vector<8x8xbf16>, vector<8x64xbf16>, vector<8x64xf32> -> vector<8x64xf32>
    %15 = vector.broadcast %8 : vector<1x64xf32> to vector<8x64xf32>
    %16 = arith.addf %14, %15 : vector<8x64xf32>
    %17 = vector.extract_strided_slice %16 {offsets = [0, 0], sizes = [8, 32], strides = [1, 1]} : vector<8x64xf32> to vector<8x32xf32>
    %18 = vector.extract_strided_slice %16 {offsets = [0, 32], sizes = [8, 32], strides = [1, 1]} : vector<8x64xf32> to vector<8x32xf32>
    %cst_21 = arith.constant dense<0xFF800000> : vector<8xf32>
    %19 = vector.multi_reduction <maximumf>, %17, %cst_21 [1] : vector<8x32xf32> to vector<8xf32>
    %20 = vector.shape_cast %19 : vector<8xf32> to vector<8x1xf32>
    %21 = vector.broadcast %20 : vector<8x1xf32> to vector<8x32xf32>
    %22 = arith.subf %17, %21 : vector<8x32xf32>
    %23 = math.exp %22 : vector<8x32xf32>
    %cst_22 = arith.constant dense<0.000000e+00> : vector<8xf32>
    %24 = vector.multi_reduction <add>, %23, %cst_22 [1] : vector<8x32xf32> to vector<8xf32>
    %25 = vector.shape_cast %24 : vector<8xf32> to vector<8x1xf32>
    %26 = tpu.reciprocal %25 {approx = true} : vector<8x1xf32> -> vector<8x1xf32>
    %27 = vector.broadcast %26 : vector<8x1xf32> to vector<8x32xf32>
    %28 = arith.mulf %23, %27 : vector<8x32xf32>
    %29 = arith.mulf %28, %18 : vector<8x32xf32>
    %cst_23 = arith.constant dense<0.000000e+00> : vector<2x32xf32>
    %30 = tpu.matmul %3, %29, %cst_23 {dimension_numbers = #tpu.dot_dimension_numbers<[1], [0], [0], [1], [0, 0, 1, 1], [], []>} : vector<2x8xf32>, vector<8x32xf32>, vector<2x32xf32> -> vector<2x32xf32>
    %31 = arith.truncf %30 : vector<2x32xf32> to vector<2x32xbf16>
    %32 = arith.truncf %9 : vector<32x32xf32> to vector<32x32xbf16>
    %cst_24 = arith.constant dense<0.000000e+00> : vector<2x32xf32>
    %33 = tpu.matmul %31, %32, %cst_24 {dimension_numbers = #tpu.dot_dimension_numbers<[1], [0], [0], [1], [0, 0, 1, 1], [], []>} : vector<2x32xbf16>, vector<32x32xbf16>, vector<2x32xf32> -> vector<2x32xf32>
    %34 = arith.truncf %6 : vector<2x32xf32> to vector<2x32xbf16>
    %35 = arith.truncf %10 : vector<32x32xf32> to vector<32x32xbf16>
    %cst_25 = arith.constant dense<0.000000e+00> : vector<2x32xf32>
    %36 = tpu.matmul %34, %35, %cst_25 {dimension_numbers = #tpu.dot_dimension_numbers<[1], [0], [0], [1], [0, 0, 1, 1], [], []>} : vector<2x32xbf16>, vector<32x32xbf16>, vector<2x32xf32> -> vector<2x32xf32>
    %37 = arith.addf %33, %36 : vector<2x32xf32>
    %38 = vector.broadcast %11 : vector<1x32xf32> to vector<2x32xf32>
    %39 = arith.addf %37, %38 : vector<2x32xf32>
    %40 = arith.addf %6, %39 : vector<2x32xf32>
    %c0_26 = arith.constant 0 : index
    %c0_27 = arith.constant 0 : index
    %41 = vector.load %arg5[%c0_26, %c0_27] : memref<8x32xf32, #tpu.memory_space<vmem>>, vector<8x32xf32>
    %42 = arith.truncf %1 : vector<12x8xf32> to vector<12x8xbf16>
    %43 = arith.truncf %41 : vector<8x32xf32> to vector<8x32xbf16>
    %cst_28 = arith.constant dense<0.000000e+00> : vector<12x32xf32>
    %44 = tpu.matmul %42, %43, %cst_28 {dimension_numbers = #tpu.dot_dimension_numbers<[1], [0], [0], [1], [0, 0, 1, 1], [], []>} : vector<12x8xbf16>, vector<8x32xbf16>, vector<12x32xf32> -> vector<12x32xf32>
    %45 = arith.truncf %0 : vector<12x12xf32> to vector<12x12xbf16>
    %46 = arith.truncf %44 : vector<12x32xf32> to vector<12x32xbf16>
    %cst_29 = arith.constant dense<0.000000e+00> : vector<12x32xf32>
    %47 = tpu.matmul %45, %46, %cst_29 {dimension_numbers = #tpu.dot_dimension_numbers<[1], [0], [0], [1], [0, 0, 1, 1], [], []>} : vector<12x12xbf16>, vector<12x32xbf16>, vector<12x32xf32> -> vector<12x32xf32>
    %c0_30 = arith.constant 0 : index
    %c0_31 = arith.constant 0 : index
    %48 = vector.load %arg6[%c0_30, %c0_31] : memref<1x32xf32, #tpu.memory_space<vmem>>, vector<1x32xf32>
    %49 = vector.broadcast %48 : vector<1x32xf32> to vector<12x32xf32>
    %50 = arith.addf %47, %49 : vector<12x32xf32>
    %cst_32 = arith.constant 0.000000e+00 : f32
    %51 = vector.broadcast %cst_32 : f32 to vector<12x32xf32>
    %52 = arith.maximumf %50, %51 : vector<12x32xf32>
    %cst_33 = arith.constant dense<0.000000e+00> : vector<8x32xf32>
    %53 = tpu.matmul %2, %52, %cst_33 {dimension_numbers = #tpu.dot_dimension_numbers<[1], [0], [0], [1], [0, 0, 1, 1], [], []>} : vector<8x12xf32>, vector<12x32xf32>, vector<8x32xf32> -> vector<8x32xf32>
    %c0_34 = arith.constant 0 : index
    %c0_35 = arith.constant 0 : index
    %54 = vector.load %arg14[%c0_34, %c0_35] : memref<32x64xf32, #tpu.memory_space<vmem>>, vector<32x64xf32>
    %c0_36 = arith.constant 0 : index
    %c0_37 = arith.constant 0 : index
    %55 = vector.load %arg15[%c0_36, %c0_37] : memref<1x64xf32, #tpu.memory_space<vmem>>, vector<1x64xf32>
    %c0_38 = arith.constant 0 : index
    %c0_39 = arith.constant 0 : index
    %56 = vector.load %arg16[%c0_38, %c0_39] : memref<32x32xf32, #tpu.memory_space<vmem>>, vector<32x32xf32>
    %c0_40 = arith.constant 0 : index
    %c0_41 = arith.constant 0 : index
    %57 = vector.load %arg17[%c0_40, %c0_41] : memref<32x32xf32, #tpu.memory_space<vmem>>, vector<32x32xf32>
    %c0_42 = arith.constant 0 : index
    %c0_43 = arith.constant 0 : index
    %58 = vector.load %arg18[%c0_42, %c0_43] : memref<1x32xf32, #tpu.memory_space<vmem>>, vector<1x32xf32>
    %59 = arith.truncf %53 : vector<8x32xf32> to vector<8x32xbf16>
    %60 = arith.truncf %54 : vector<32x64xf32> to vector<32x64xbf16>
    %cst_44 = arith.constant dense<0.000000e+00> : vector<8x64xf32>
    %61 = tpu.matmul %59, %60, %cst_44 {dimension_numbers = #tpu.dot_dimension_numbers<[1], [0], [0], [1], [0, 0, 1, 1], [], []>} : vector<8x32xbf16>, vector<32x64xbf16>, vector<8x64xf32> -> vector<8x64xf32>
    %62 = vector.broadcast %55 : vector<1x64xf32> to vector<8x64xf32>
    %63 = arith.addf %61, %62 : vector<8x64xf32>
    %64 = vector.extract_strided_slice %63 {offsets = [0, 0], sizes = [8, 32], strides = [1, 1]} : vector<8x64xf32> to vector<8x32xf32>
    %65 = vector.extract_strided_slice %63 {offsets = [0, 32], sizes = [8, 32], strides = [1, 1]} : vector<8x64xf32> to vector<8x32xf32>
    %cst_45 = arith.constant dense<0xFF800000> : vector<8xf32>
    %66 = vector.multi_reduction <maximumf>, %64, %cst_45 [1] : vector<8x32xf32> to vector<8xf32>
    %67 = vector.shape_cast %66 : vector<8xf32> to vector<8x1xf32>
    %68 = vector.broadcast %67 : vector<8x1xf32> to vector<8x32xf32>
    %69 = arith.subf %64, %68 : vector<8x32xf32>
    %70 = math.exp %69 : vector<8x32xf32>
    %cst_46 = arith.constant dense<0.000000e+00> : vector<8xf32>
    %71 = vector.multi_reduction <add>, %70, %cst_46 [1] : vector<8x32xf32> to vector<8xf32>
    %72 = vector.shape_cast %71 : vector<8xf32> to vector<8x1xf32>
    %73 = tpu.reciprocal %72 {approx = true} : vector<8x1xf32> -> vector<8x1xf32>
    %74 = vector.broadcast %73 : vector<8x1xf32> to vector<8x32xf32>
    %75 = arith.mulf %70, %74 : vector<8x32xf32>
    %76 = arith.mulf %75, %65 : vector<8x32xf32>
    %cst_47 = arith.constant dense<0.000000e+00> : vector<2x32xf32>
    %77 = tpu.matmul %3, %76, %cst_47 {dimension_numbers = #tpu.dot_dimension_numbers<[1], [0], [0], [1], [0, 0, 1, 1], [], []>} : vector<2x8xf32>, vector<8x32xf32>, vector<2x32xf32> -> vector<2x32xf32>
    %78 = arith.truncf %77 : vector<2x32xf32> to vector<2x32xbf16>
    %79 = arith.truncf %56 : vector<32x32xf32> to vector<32x32xbf16>
    %cst_48 = arith.constant dense<0.000000e+00> : vector<2x32xf32>
    %80 = tpu.matmul %78, %79, %cst_48 {dimension_numbers = #tpu.dot_dimension_numbers<[1], [0], [0], [1], [0, 0, 1, 1], [], []>} : vector<2x32xbf16>, vector<32x32xbf16>, vector<2x32xf32> -> vector<2x32xf32>
    %81 = arith.truncf %40 : vector<2x32xf32> to vector<2x32xbf16>
    %82 = arith.truncf %57 : vector<32x32xf32> to vector<32x32xbf16>
    %cst_49 = arith.constant dense<0.000000e+00> : vector<2x32xf32>
    %83 = tpu.matmul %81, %82, %cst_49 {dimension_numbers = #tpu.dot_dimension_numbers<[1], [0], [0], [1], [0, 0, 1, 1], [], []>} : vector<2x32xbf16>, vector<32x32xbf16>, vector<2x32xf32> -> vector<2x32xf32>
    %84 = arith.addf %80, %83 : vector<2x32xf32>
    %85 = vector.broadcast %58 : vector<1x32xf32> to vector<2x32xf32>
    %86 = arith.addf %84, %85 : vector<2x32xf32>
    %87 = arith.addf %40, %86 : vector<2x32xf32>
    %c0_50 = arith.constant 0 : index
    %c0_51 = arith.constant 0 : index
    %88 = vector.load %arg7[%c0_50, %c0_51] : memref<32x16xf32, #tpu.memory_space<vmem>>, vector<32x16xf32>
    %89 = arith.truncf %52 : vector<12x32xf32> to vector<12x32xbf16>
    %90 = arith.truncf %88 : vector<32x16xf32> to vector<32x16xbf16>
    %cst_52 = arith.constant dense<0.000000e+00> : vector<12x16xf32>
    %91 = tpu.matmul %89, %90, %cst_52 {dimension_numbers = #tpu.dot_dimension_numbers<[1], [0], [0], [1], [0, 0, 1, 1], [], []>} : vector<12x32xbf16>, vector<32x16xbf16>, vector<12x16xf32> -> vector<12x16xf32>
    %92 = arith.truncf %0 : vector<12x12xf32> to vector<12x12xbf16>
    %93 = arith.truncf %91 : vector<12x16xf32> to vector<12x16xbf16>
    %cst_53 = arith.constant dense<0.000000e+00> : vector<12x16xf32>
    %94 = tpu.matmul %92, %93, %cst_53 {dimension_numbers = #tpu.dot_dimension_numbers<[1], [0], [0], [1], [0, 0, 1, 1], [], []>} : vector<12x12xbf16>, vector<12x16xbf16>, vector<12x16xf32> -> vector<12x16xf32>
    %c0_54 = arith.constant 0 : index
    %c0_55 = arith.constant 0 : index
    %95 = vector.load %arg8[%c0_54, %c0_55] : memref<1x16xf32, #tpu.memory_space<vmem>>, vector<1x16xf32>
    %96 = vector.broadcast %95 : vector<1x16xf32> to vector<12x16xf32>
    %97 = arith.addf %94, %96 : vector<12x16xf32>
    %cst_56 = arith.constant 0.000000e+00 : f32
    %98 = vector.broadcast %cst_56 : f32 to vector<12x16xf32>
    %99 = arith.maximumf %97, %98 : vector<12x16xf32>
    %cst_57 = arith.constant dense<0.000000e+00> : vector<8x16xf32>
    %100 = tpu.matmul %2, %99, %cst_57 {dimension_numbers = #tpu.dot_dimension_numbers<[1], [0], [0], [1], [0, 0, 1, 1], [], []>} : vector<8x12xf32>, vector<12x16xf32>, vector<8x16xf32> -> vector<8x16xf32>
    %c0_58 = arith.constant 0 : index
    %c0_59 = arith.constant 0 : index
    %101 = vector.load %arg19[%c0_58, %c0_59] : memref<16x32xf32, #tpu.memory_space<vmem>>, vector<16x32xf32>
    %c0_60 = arith.constant 0 : index
    %c0_61 = arith.constant 0 : index
    %102 = vector.load %arg20[%c0_60, %c0_61] : memref<1x32xf32, #tpu.memory_space<vmem>>, vector<1x32xf32>
    %c0_62 = arith.constant 0 : index
    %c0_63 = arith.constant 0 : index
    %103 = vector.load %arg21[%c0_62, %c0_63] : memref<16x32xf32, #tpu.memory_space<vmem>>, vector<16x32xf32>
    %c0_64 = arith.constant 0 : index
    %c0_65 = arith.constant 0 : index
    %104 = vector.load %arg22[%c0_64, %c0_65] : memref<32x32xf32, #tpu.memory_space<vmem>>, vector<32x32xf32>
    %c0_66 = arith.constant 0 : index
    %c0_67 = arith.constant 0 : index
    %105 = vector.load %arg23[%c0_66, %c0_67] : memref<1x32xf32, #tpu.memory_space<vmem>>, vector<1x32xf32>
    %106 = arith.truncf %100 : vector<8x16xf32> to vector<8x16xbf16>
    %107 = arith.truncf %101 : vector<16x32xf32> to vector<16x32xbf16>
    %cst_68 = arith.constant dense<0.000000e+00> : vector<8x32xf32>
    %108 = tpu.matmul %106, %107, %cst_68 {dimension_numbers = #tpu.dot_dimension_numbers<[1], [0], [0], [1], [0, 0, 1, 1], [], []>} : vector<8x16xbf16>, vector<16x32xbf16>, vector<8x32xf32> -> vector<8x32xf32>
    %109 = vector.broadcast %102 : vector<1x32xf32> to vector<8x32xf32>
    %110 = arith.addf %108, %109 : vector<8x32xf32>
    %111 = vector.extract_strided_slice %110 {offsets = [0, 0], sizes = [8, 16], strides = [1, 1]} : vector<8x32xf32> to vector<8x16xf32>
    %112 = vector.extract_strided_slice %110 {offsets = [0, 16], sizes = [8, 16], strides = [1, 1]} : vector<8x32xf32> to vector<8x16xf32>
    %cst_69 = arith.constant dense<0xFF800000> : vector<8xf32>
    %113 = vector.multi_reduction <maximumf>, %111, %cst_69 [1] : vector<8x16xf32> to vector<8xf32>
    %114 = vector.shape_cast %113 : vector<8xf32> to vector<8x1xf32>
    %115 = vector.broadcast %114 : vector<8x1xf32> to vector<8x16xf32>
    %116 = arith.subf %111, %115 : vector<8x16xf32>
    %117 = math.exp %116 : vector<8x16xf32>
    %cst_70 = arith.constant dense<0.000000e+00> : vector<8xf32>
    %118 = vector.multi_reduction <add>, %117, %cst_70 [1] : vector<8x16xf32> to vector<8xf32>
    %119 = vector.shape_cast %118 : vector<8xf32> to vector<8x1xf32>
    %120 = tpu.reciprocal %119 {approx = true} : vector<8x1xf32> -> vector<8x1xf32>
    %121 = vector.broadcast %120 : vector<8x1xf32> to vector<8x16xf32>
    %122 = arith.mulf %117, %121 : vector<8x16xf32>
    %123 = arith.mulf %122, %112 : vector<8x16xf32>
    %cst_71 = arith.constant dense<0.000000e+00> : vector<2x16xf32>
    %124 = tpu.matmul %3, %123, %cst_71 {dimension_numbers = #tpu.dot_dimension_numbers<[1], [0], [0], [1], [0, 0, 1, 1], [], []>} : vector<2x8xf32>, vector<8x16xf32>, vector<2x16xf32> -> vector<2x16xf32>
    %125 = arith.truncf %124 : vector<2x16xf32> to vector<2x16xbf16>
    %126 = arith.truncf %103 : vector<16x32xf32> to vector<16x32xbf16>
    %cst_72 = arith.constant dense<0.000000e+00> : vector<2x32xf32>
    %127 = tpu.matmul %125, %126, %cst_72 {dimension_numbers = #tpu.dot_dimension_numbers<[1], [0], [0], [1], [0, 0, 1, 1], [], []>} : vector<2x16xbf16>, vector<16x32xbf16>, vector<2x32xf32> -> vector<2x32xf32>
    %128 = arith.truncf %87 : vector<2x32xf32> to vector<2x32xbf16>
    %129 = arith.truncf %104 : vector<32x32xf32> to vector<32x32xbf16>
    %cst_73 = arith.constant dense<0.000000e+00> : vector<2x32xf32>
    %130 = tpu.matmul %128, %129, %cst_73 {dimension_numbers = #tpu.dot_dimension_numbers<[1], [0], [0], [1], [0, 0, 1, 1], [], []>} : vector<2x32xbf16>, vector<32x32xbf16>, vector<2x32xf32> -> vector<2x32xf32>
    %131 = arith.addf %127, %130 : vector<2x32xf32>
    %132 = vector.broadcast %105 : vector<1x32xf32> to vector<2x32xf32>
    %133 = arith.addf %131, %132 : vector<2x32xf32>
    %134 = arith.addf %87, %133 : vector<2x32xf32>
    %cst_74 = arith.constant dense<0.000000e+00> : vector<8x32xf32>
    %135 = tpu.matmul %4, %134, %cst_74 {dimension_numbers = #tpu.dot_dimension_numbers<[1], [0], [0], [1], [0, 0, 1, 1], [], []>} : vector<8x2xf32>, vector<2x32xf32>, vector<8x32xf32> -> vector<8x32xf32>
    %c0_75 = arith.constant 0 : index
    %c0_76 = arith.constant 0 : index
    %136 = vector.load %arg24[%c0_75, %c0_76] : memref<16x32xf32, #tpu.memory_space<vmem>>, vector<16x32xf32>
    %137 = arith.truncf %100 : vector<8x16xf32> to vector<8x16xbf16>
    %138 = arith.truncf %136 : vector<16x32xf32> to vector<16x32xbf16>
    %cst_77 = arith.constant dense<0.000000e+00> : vector<8x32xf32>
    %139 = tpu.matmul %137, %138, %cst_77 {dimension_numbers = #tpu.dot_dimension_numbers<[1], [0], [0], [1], [0, 0, 1, 1], [], []>} : vector<8x16xbf16>, vector<16x32xbf16>, vector<8x32xf32> -> vector<8x32xf32>
    %c0_78 = arith.constant 0 : index
    %c0_79 = arith.constant 0 : index
    %140 = vector.load %arg25[%c0_78, %c0_79] : memref<32x32xf32, #tpu.memory_space<vmem>>, vector<32x32xf32>
    %141 = arith.truncf %135 : vector<8x32xf32> to vector<8x32xbf16>
    %142 = arith.truncf %140 : vector<32x32xf32> to vector<32x32xbf16>
    %cst_80 = arith.constant dense<0.000000e+00> : vector<8x32xf32>
    %143 = tpu.matmul %141, %142, %cst_80 {dimension_numbers = #tpu.dot_dimension_numbers<[1], [0], [0], [1], [0, 0, 1, 1], [], []>} : vector<8x32xbf16>, vector<32x32xbf16>, vector<8x32xf32> -> vector<8x32xf32>
    %144 = arith.addf %139, %143 : vector<8x32xf32>
    %c0_81 = arith.constant 0 : index
    %c0_82 = arith.constant 0 : index
    %145 = vector.load %arg26[%c0_81, %c0_82] : memref<1x32xf32, #tpu.memory_space<vmem>>, vector<1x32xf32>
    %146 = vector.broadcast %145 : vector<1x32xf32> to vector<8x32xf32>
    %147 = arith.addf %144, %146 : vector<8x32xf32>
    %cst_83 = arith.constant 0.000000e+00 : f32
    %148 = vector.broadcast %cst_83 : f32 to vector<8x32xf32>
    %149 = arith.maximumf %147, %148 : vector<8x32xf32>
    %c0_84 = arith.constant 0 : index
    %c0_85 = arith.constant 0 : index
    %150 = vector.load %arg27[%c0_84, %c0_85] : memref<32x128xf32, #tpu.memory_space<vmem>>, vector<32x128xf32>
    %151 = arith.truncf %149 : vector<8x32xf32> to vector<8x32xbf16>
    %152 = arith.truncf %150 : vector<32x128xf32> to vector<32x128xbf16>
    %cst_86 = arith.constant dense<0.000000e+00> : vector<8x128xf32>
    %153 = tpu.matmul %151, %152, %cst_86 {dimension_numbers = #tpu.dot_dimension_numbers<[1], [0], [0], [1], [0, 0, 1, 1], [], []>} : vector<8x32xbf16>, vector<32x128xbf16>, vector<8x128xf32> -> vector<8x128xf32>
    %c0_87 = arith.constant 0 : index
    %c0_88 = arith.constant 0 : index
    %154 = vector.load %arg28[%c0_87, %c0_88] : memref<1x128xf32, #tpu.memory_space<vmem>>, vector<1x128xf32>
    %155 = vector.broadcast %154 : vector<1x128xf32> to vector<8x128xf32>
    %156 = arith.addf %153, %155 : vector<8x128xf32>
    %cst_89 = arith.constant dense<0.000000e+00> : vector<8xf32>
    %157 = vector.multi_reduction <add>, %4, %cst_89 [1] : vector<8x2xf32> to vector<8xf32>
    %158 = vector.shape_cast %157 : vector<8xf32> to vector<8x1xf32>
    %cst_90 = arith.constant 5.000000e-01 : f32
    %159 = vector.broadcast %cst_90 : f32 to vector<8x1xf32>
    %160 = arith.cmpf ogt, %158, %159 : vector<8x1xf32>
    %cst_91 = arith.constant 0xFF800000 : f32
    %161 = vector.shape_cast %160 : vector<8x1xi1> to vector<8x1xi1>
    %162 = vector.broadcast %161 : vector<8x1xi1> to vector<8x128xi1>
    %163 = vector.broadcast %cst_91 : f32 to vector<8x128xf32>
    %164 = arith.select %162, %156, %163 : vector<8x128xi1>, vector<8x128xf32>
    %c0_92 = arith.constant 0 : index
    %c0_93 = arith.constant 0 : index
    %165 = vector.load %arg29[%c0_92, %c0_93] : memref<8x128xf32, #tpu.memory_space<vmem>>, vector<8x128xf32>
    tpu.vector_store %arg29[%c0_92, %c0_93], %164 {strides = array<i32>} : memref<8x128xf32, #tpu.memory_space<vmem>>, vector<8x128xf32>,
    return
  }
}

</mosaic_0001>

<llo_original>
// kernel: fwd.1
$region0: #{fwd.1}
  #allocation0 [shape = 'u32[]', space=smem, size = 0x4, offset = 0x4, fixed_abs, tag = 'smem constant byte address 0x4 - core index']
  #allocation1 [shape = 'u32[144,128]{1,0:T(1,128)}', space=vmem, size = 0x12000, scoped, tag = 'internal scratch']
  %s0 = inlined_call_operand.smem [shape: u32[30], index: -1, kind: input, shape index: {}]
  %s1 = sld [smem:[%s0]]
  %s2 = scalar_lea.smem %s0, 1
  %s3 = sld [smem:[%s2]]
  %s4 = scalar_lea.smem %s0, 2
  %s5 = sld [smem:[%s4]]
  %s6 = scalar_lea.smem %s0, 3
  %s7 = sld [smem:[%s6]]
  %s8 = scalar_lea.smem %s0, 4
  %s9 = sld [smem:[%s8]]
  %s10 = scalar_lea.smem %s0, 5
  %s11 = sld [smem:[%s10]]
  %s12 = scalar_lea.smem %s0, 6
  %s13 = sld [smem:[%s12]]
  %s14 = scalar_lea.smem %s0, 7
  %s15 = sld [smem:[%s14]]
  %s16 = scalar_lea.smem %s0, 8
  %s17 = sld [smem:[%s16]]
  %s18 = scalar_lea.smem %s0, 9
  %s19 = sld [smem:[%s18]]
  %s20 = scalar_lea.smem %s0, 10
  %s21 = sld [smem:[%s20]]
  %s22 = scalar_lea.smem %s0, 11
  %s23 = sld [smem:[%s22]]
  %s24 = scalar_lea.smem %s0, 12
  %s25 = sld [smem:[%s24]]
  %s26 = scalar_lea.smem %s0, 13
  %s27 = sld [smem:[%s26]]
  %s28 = scalar_lea.smem %s0, 14
  %s29 = sld [smem:[%s28]]
  %s30 = scalar_lea.smem %s0, 15
  %s31 = sld [smem:[%s30]]
  %s32 = scalar_lea.smem %s0, 16
  %s33 = sld [smem:[%s32]]
  %s34 = scalar_lea.smem %s0, 17
  %s35 = sld [smem:[%s34]]
  %s36 = scalar_lea.smem %s0, 18
  %s37 = sld [smem:[%s36]]
  %s38 = scalar_lea.smem %s0, 19
  %s39 = sld [smem:[%s38]]
  %s40 = scalar_lea.smem %s0, 20
  %s41 = sld [smem:[%s40]]
  %s42 = scalar_lea.smem %s0, 21
  %s43 = sld [smem:[%s42]]
  %s44 = scalar_lea.smem %s0, 22
  %s45 = sld [smem:[%s44]]
  %s46 = scalar_lea.smem %s0, 23
  %s47 = sld [smem:[%s46]]
  %s48 = scalar_lea.smem %s0, 24
  %s49 = sld [smem:[%s48]]
  %s50 = scalar_lea.smem %s0, 25
  %s51 = sld [smem:[%s50]]
  %s52 = scalar_lea.smem %s0, 26
  %s53 = sld [smem:[%s52]]
  %s54 = scalar_lea.smem %s0, 27
  %s55 = sld [smem:[%s54]]
  %s56 = scalar_lea.smem %s0, 28
  %s57 = sld [smem:[%s56]]
  %s58 = scalar_lea.smem %s0, 29
  %s59 = sld [smem:[%s58]]
  %s60 = sld [smem:[#allocation0]]
  $region194: #{fwd.1} parent=0
    _
  %s62 = ssub.s32 1, %s60
  %s63 = scalar_select 0, %s62, %s60
  $region1: #{fwd.1} parent=0
    #allocation2 [shape = 'u8[8192]{0}', space=vmem, size = 0x2000, scoped, tag = 'input window, operand 0, single buffered']
    #allocation3 [shape = 's32[1]{0}', space=sflag, size = 0x4, scoped, tag = 'scoped memory for fwd.1']
    #allocation4 [shape = 'u8[4096]{0}', space=vmem, size = 0x1000, scoped, tag = 'input window, operand 2, single buffered']
    #allocation5 [shape = 's32[1]{0}', space=sflag, size = 0x4, scoped, tag = 'scoped memory for fwd.1']
    #allocation6 [shape = 'u8[1024]{0}', space=vmem, size = 0x400, scoped, tag = 'input window, operand 3, single buffered']
    #allocation7 [shape = 'u8[4096]{0}', space=vmem, size = 0x1000, scoped, tag = 'input window, operand 5, single buffered']
    #allocation8 [shape = 's32[1]{0}', space=sflag, size = 0x4, scoped, tag = 'scoped memory for fwd.1']
    #allocation9 [shape = 'u8[512]{0}', space=vmem, size = 0x400, scoped, tag = 'input window, operand 8, single buffered']
    #allocation10 [shape = 'u8[4096]{0}', space=vmem, size = 0x1000, scoped, tag = 'input window, operand 9, single buffered']
    #allocation11 [shape = 's32[1]{0}', space=sflag, size = 0x4, scoped, tag = 'scoped memory for fwd.1']
    #allocation12 [shape = 'u8[512]{0}', space=vmem, size = 0x400, scoped, tag = 'input window, operand 10, single buffered']
    #allocation13 [shape = 'u8[512]{0}', space=vmem, size = 0x400, scoped, tag = 'input window, operand 13, single buffered']
    #allocation14 [shape = 's32[1]{0}', space=sflag, size = 0x4, scoped, tag = 'scoped memory for fwd.1']
    #allocation15 [shape = 'u8[512]{0}', space=vmem, size = 0x400, scoped, tag = 'input window, operand 15, single buffered']
    #allocation16 [shape = 'u8[16384]{0}', space=vmem, size = 0x4000, scoped, tag = 'input window, operand 17, single buffered']
    #allocation17 [shape = 's32[1]{0}', space=sflag, size = 0x4, scoped, tag = 'scoped memory for fwd.1']
    #allocation18 [shape = 'u8[512]{0}', space=vmem, size = 0x400, scoped, tag = 'input window, operand 18, single buffered']
    #allocation19 [shape = 'u8[8192]{0}', space=vmem, size = 0x2000, scoped, tag = 'input window, operand 19, single buffered']
    #allocation20 [shape = 's32[1]{0}', space=sflag, size = 0x4, scoped, tag = 'scoped memory for fwd.1']
    #allocation21 [shape = 'u8[512]{0}', space=vmem, size = 0x400, scoped, tag = 'input window, operand 20, single buffered']
    #allocation22 [shape = 'u8[8192]{0}', space=vmem, size = 0x2000, scoped, tag = 'input window, operand 21, single buffered']
    #allocation23 [shape = 's32[1]{0}', space=sflag, size = 0x4, scoped, tag = 'scoped memory for fwd.1']
    #allocation24 [shape = 'u8[8192]{0}', space=vmem, size = 0x2000, scoped, tag = 'input window, operand 24, single buffered']
    #allocation25 [shape = 'u8[16384]{0}', space=vmem, size = 0x4000, scoped, tag = 'input window, operand 25, single buffered']
    #allocation26 [shape = 's32[1]{0}', space=sflag, size = 0x4, scoped, tag = 'scoped memory for fwd.1']
    #allocation27 [shape = 'u8[16384]{0}', space=vmem, size = 0x4000, scoped, tag = 'input window, operand 27, single buffered']
    %64 = vsyncpa [#allocation3], 0
    %65 = vsyncpa [#allocation5], 0
    %66 = vsyncpa [#allocation8], 0
    %67 = vsyncpa [#allocation11], 0
    %68 = vsyncpa [#allocation14], 0
    %69 = vsyncpa [#allocation17], 0
    %70 = vsyncpa [#allocation20], 0
    %71 = vsyncpa [#allocation23], 0
    %72 = vsyncpa [#allocation26], 0
    // Predicated region
    $region2: #{fwd.1} parent=1 // pred_check
      _
    $region3: #{fwd.1} parent=1 // pred_check_branch
      %74 = sbr.rel (0) target = $region5
    $region4: #{fwd.1} parent=1 // pred_region
      %s76 = ssub.s32 256, 256
      %77 = vsyncadd [#allocation3], %s76
      %s78 = sshll.u32 [#allocation2], 4
      %s79 = int_to_ptr.vmem [resolvable:$true] %s78
      %84 = dma.hbm_to_vmem [thread:$0]  %s1, 256, %s79, [#allocation3], 128, 128, 8
    $region5: #{fwd.1} parent=1 // pred_fallthru
      _
    // Predicated region
    $region6: #{fwd.1} parent=1 // pred_check
      _
    $region7: #{fwd.1} parent=1 // pred_check_branch
      %86 = sbr.rel (0) target = $region9
    $region8: #{fwd.1} parent=1 // pred_region
      _
    $region9: #{fwd.1} parent=1 // pred_fallthru
      _
    // Predicated region
    $region10: #{fwd.1} parent=1 // pred_check
      _
    $region11: #{fwd.1} parent=1 // pred_check_branch
      %88 = sbr.rel (0) target = $region13
    $region12: #{fwd.1} parent=1 // pred_region
      %s90 = ssub.s32 128, 128
      %91 = vsyncadd [#allocation5], %s90
      %s93 = sshll.u32 [#allocation4], 4
      %s94 = int_to_ptr.vmem [resolvable:$true] %s93
      %96 = dma.hbm_to_vmem [thread:$0]  %s5, 128, %s94, [#allocation5]
    $region13: #{fwd.1} parent=1 // pred_fallthru
      _
    // Predicated region
    $region14: #{fwd.1} parent=1 // pred_check
      _
    $region15: #{fwd.1} parent=1 // pred_check_branch
      %98 = sbr.rel (0) target = $region17
    $region16: #{fwd.1} parent=1 // pred_region
      %s100 = ssub.s32 32, 32
      %101 = vsyncadd [#allocation5], %s100
      %s103 = sshll.u32 [#allocation6], 4
      %s104 = int_to_ptr.vmem [resolvable:$true] %s103
      %106 = dma.hbm_to_vmem [thread:$0]  %s7, 32, %s104, [#allocation5]
    $region17: #{fwd.1} parent=1 // pred_fallthru
      _
    // Predicated region
    $region18: #{fwd.1} parent=1 // pred_check
      _
    $region19: #{fwd.1} parent=1 // pred_check_branch
      %108 = sbr.rel (0) target = $region21
    $region20: #{fwd.1} parent=1 // pred_region
      _
    $region21: #{fwd.1} parent=1 // pred_fallthru
      _
    // Predicated region
    $region22: #{fwd.1} parent=1 // pred_check
      _
    $region23: #{fwd.1} parent=1 // pred_check_branch
      %110 = sbr.rel (0) target = $region25
    $region24: #{fwd.1} parent=1 // pred_region
      %s112 = ssub.s32 128, 128
      %113 = vsyncadd [#allocation8], %s112
      %s115 = sshll.u32 [#allocation7], 4
      %s116 = int_to_ptr.vmem [resolvable:$true] %s115
      %118 = dma.hbm_to_vmem [thread:$0]  %s11, 128, %s116, [#allocation8]
    $region25: #{fwd.1} parent=1 // pred_fallthru
      _
    // Predicated region
    $region26: #{fwd.1} parent=1 // pred_check
      _
    $region27: #{fwd.1} parent=1 // pred_check_branch
      %120 = sbr.rel (0) target = $region29
    $region28: #{fwd.1} parent=1 // pred_region
      _
    $region29: #{fwd.1} parent=1 // pred_fallthru
      _
    // Predicated region
    $region30: #{fwd.1} parent=1 // pred_check
      _
    $region31: #{fwd.1} parent=1 // pred_check_branch
      %122 = sbr.rel (0) target = $region33
    $region32: #{fwd.1} parent=1 // pred_region
      _
    $region33: #{fwd.1} parent=1 // pred_fallthru
      _
    // Predicated region
    $region34: #{fwd.1} parent=1 // pred_check
      _
    $region35: #{fwd.1} parent=1 // pred_check_branch
      %124 = sbr.rel (0) target = $region37
    $region36: #{fwd.1} parent=1 // pred_region
      %s126 = ssub.s32 16, 16
      %127 = vsyncadd [#allocation8], %s126
      %s129 = sshll.u32 [#allocation9], 4
      %s130 = int_to_ptr.vmem [resolvable:$true] %s129
      %132 = dma.hbm_to_vmem [thread:$0]  %s17, 16, %s130, [#allocation8]
    $region37: #{fwd.1} parent=1 // pred_fallthru
      _
    // Predicated region
    $region38: #{fwd.1} parent=1 // pred_check
      _
    $region39: #{fwd.1} parent=1 // pred_check_branch
      %134 = sbr.rel (0) target = $region41
    $region40: #{fwd.1} parent=1 // pred_region
      %s136 = ssub.s32 128, 128
      %137 = vsyncadd [#allocation11], %s136
      %s139 = sshll.u32 [#allocation10], 4
      %s140 = int_to_ptr.vmem [resolvable:$true] %s139
      %142 = dma.hbm_to_vmem [thread:$0]  %s19, 128, %s140, [#allocation11]
    $region41: #{fwd.1} parent=1 // pred_fallthru
      _
    // Predicated region
    $region42: #{fwd.1} parent=1 // pred_check
      _
    $region43: #{fwd.1} parent=1 // pred_check_branch
      %144 = sbr.rel (0) target = $region45
    $region44: #{fwd.1} parent=1 // pred_region
      %s146 = ssub.s32 16, 16
      %147 = vsyncadd [#allocation11], %s146
      %s149 = sshll.u32 [#allocation12], 4
      %s150 = int_to_ptr.vmem [resolvable:$true] %s149
      %152 = dma.hbm_to_vmem [thread:$0]  %s21, 16, %s150, [#allocation11]
    $region45: #{fwd.1} parent=1 // pred_fallthru
      _
    // Predicated region
    $region46: #{fwd.1} parent=1 // pred_check
      _
    $region47: #{fwd.1} parent=1 // pred_check_branch
      %154 = sbr.rel (0) target = $region49
    $region48: #{fwd.1} parent=1 // pred_region
      _
    $region49: #{fwd.1} parent=1 // pred_fallthru
      _
    // Predicated region
    $region50: #{fwd.1} parent=1 // pred_check
      _
    $region51: #{fwd.1} parent=1 // pred_check_branch
      %156 = sbr.rel (0) target = $region53
    $region52: #{fwd.1} parent=1 // pred_region
      _
    $region53: #{fwd.1} parent=1 // pred_fallthru
      _
    // Predicated region
    $region54: #{fwd.1} parent=1 // pred_check
      _
    $region55: #{fwd.1} parent=1 // pred_check_branch
      %158 = sbr.rel (0) target = $region57
    $region56: #{fwd.1} parent=1 // pred_region
      %s160 = ssub.s32 16, 16
      %161 = vsyncadd [#allocation14], %s160
      %s163 = sshll.u32 [#allocation13], 4
      %s164 = int_to_ptr.vmem [resolvable:$true] %s163
      %166 = dma.hbm_to_vmem [thread:$0]  %s27, 16, %s164, [#allocation14]
    $region57: #{fwd.1} parent=1 // pred_fallthru
      _
    // Predicated region
    $region58: #{fwd.1} parent=1 // pred_check
      _
    $region59: #{fwd.1} parent=1 // pred_check_branch
      %168 = sbr.rel (0) target = $region61
    $region60: #{fwd.1} parent=1 // pred_region
      _
    $region61: #{fwd.1} parent=1 // pred_fallthru
      _
    // Predicated region
    $region62: #{fwd.1} parent=1 // pred_check
      _
    $region63: #{fwd.1} parent=1 // pred_check_branch
      %170 = sbr.rel (0) target = $region65
    $region64: #{fwd.1} parent=1 // pred_region
      %s172 = ssub.s32 16, 16
      %173 = vsyncadd [#allocation14], %s172
      %s175 = sshll.u32 [#allocation15], 4
      %s176 = int_to_ptr.vmem [resolvable:$true] %s175
      %178 = dma.hbm_to_vmem [thread:$0]  %s31, 16, %s176, [#allocation14]
    $region65: #{fwd.1} parent=1 // pred_fallthru
      _
    // Predicated region
    $region66: #{fwd.1} parent=1 // pred_check
      _
    $region67: #{fwd.1} parent=1 // pred_check_branch
      %180 = sbr.rel (0) target = $region69
    $region68: #{fwd.1} parent=1 // pred_region
      _
    $region69: #{fwd.1} parent=1 // pred_fallthru
      _
    // Predicated region
    $region70: #{fwd.1} parent=1 // pred_check
      _
    $region71: #{fwd.1} parent=1 // pred_check_branch
      %182 = sbr.rel (0) target = $region73
    $region72: #{fwd.1} parent=1 // pred_region
      %s184 = ssub.s32 512, 512
      %185 = vsyncadd [#allocation17], %s184
      %s186 = sshll.u32 [#allocation16], 4
      %s187 = int_to_ptr.vmem [resolvable:$true] %s186
      %192 = dma.hbm_to_vmem [thread:$0]  %s35, 512, %s187, [#allocation17], 128, 128, 8
    $region73: #{fwd.1} parent=1 // pred_fallthru
      _
    // Predicated region
    $region74: #{fwd.1} parent=1 // pred_check
      _
    $region75: #{fwd.1} parent=1 // pred_check_branch
      %194 = sbr.rel (0) target = $region77
    $region76: #{fwd.1} parent=1 // pred_region
      %s196 = ssub.s32 16, 16
      %197 = vsyncadd [#allocation17], %s196
      %s199 = sshll.u32 [#allocation18], 4
      %s200 = int_to_ptr.vmem [resolvable:$true] %s199
      %202 = dma.hbm_to_vmem [thread:$0]  %s37, 16, %s200, [#allocation17]
    $region77: #{fwd.1} parent=1 // pred_fallthru
      _
    // Predicated region
    $region78: #{fwd.1} parent=1 // pred_check
      _
    $region79: #{fwd.1} parent=1 // pred_check_branch
      %204 = sbr.rel (0) target = $region81
    $region80: #{fwd.1} parent=1 // pred_region
      %s206 = ssub.s32 256, 256
      %207 = vsyncadd [#allocation20], %s206
      %s208 = sshll.u32 [#allocation19], 4
      %s209 = int_to_ptr.vmem [resolvable:$true] %s208
      %214 = dma.hbm_to_vmem [thread:$0]  %s39, 256, %s209, [#allocation20], 128, 128, 8
    $region81: #{fwd.1} parent=1 // pred_fallthru
      _
    // Predicated region
    $region82: #{fwd.1} parent=1 // pred_check
      _
    $region83: #{fwd.1} parent=1 // pred_check_branch
      %216 = sbr.rel (0) target = $region85
    $region84: #{fwd.1} parent=1 // pred_region
      %s218 = ssub.s32 16, 16
      %219 = vsyncadd [#allocation20], %s218
      %s221 = sshll.u32 [#allocation21], 4
      %s222 = int_to_ptr.vmem [resolvable:$true] %s221
      %224 = dma.hbm_to_vmem [thread:$0]  %s41, 16, %s222, [#allocation20]
    $region85: #{fwd.1} parent=1 // pred_fallthru
      _
    // Predicated region
    $region86: #{fwd.1} parent=1 // pred_check
      _
    $region87: #{fwd.1} parent=1 // pred_check_branch
      %226 = sbr.rel (0) target = $region89
    $region88: #{fwd.1} parent=1 // pred_region
      %s228 = ssub.s32 256, 256
      %229 = vsyncadd [#allocation23], %s228
      %s230 = sshll.u32 [#allocation22], 4
      %s231 = int_to_ptr.vmem [resolvable:$true] %s230
      %236 = dma.hbm_to_vmem [thread:$0]  %s43, 256, %s231, [#allocation23], 128, 128, 8
    $region89: #{fwd.1} parent=1 // pred_fallthru
      _
    // Predicated region
    $region90: #{fwd.1} parent=1 // pred_check
      _
    $region91: #{fwd.1} parent=1 // pred_check_branch
      %238 = sbr.rel (0) target = $region93
    $region92: #{fwd.1} parent=1 // pred_region
      _
    $region93: #{fwd.1} parent=1 // pred_fallthru
      _
    // Predicated region
    $region94: #{fwd.1} parent=1 // pred_check
      _
    $region95: #{fwd.1} parent=1 // pred_check_branch
      %240 = sbr.rel (0) target = $region97
    $region96: #{fwd.1} parent=1 // pred_region
      _
    $region97: #{fwd.1} parent=1 // pred_fallthru
      _
    // Predicated region
    $region98: #{fwd.1} parent=1 // pred_check
      _
    $region99: #{fwd.1} parent=1 // pred_check_branch
      %242 = sbr.rel (0) target = $region101
    $region100: #{fwd.1} parent=1 // pred_region
      %s244 = ssub.s32 256, 256
      %245 = vsyncadd [#allocation23], %s244
      %s246 = sshll.u32 [#allocation24], 4
      %s247 = int_to_ptr.vmem [resolvable:$true] %s246
      %252 = dma.hbm_to_vmem [thread:$0]  %s49, 256, %s247, [#allocation23], 128, 128, 8
    $region101: #{fwd.1} parent=1 // pred_fallthru
      _
    // Predicated region
    $region102: #{fwd.1} parent=1 // pred_check
      _
    $region103: #{fwd.1} parent=1 // pred_check_branch
      %254 = sbr.rel (0) target = $region105
    $region104: #{fwd.1} parent=1 // pred_region
      %s256 = ssub.s32 512, 512
      %257 = vsyncadd [#allocation26], %s256
      %s258 = sshll.u32 [#allocation25], 4
      %s259 = int_to_ptr.vmem [resolvable:$true] %s258
      %264 = dma.hbm_to_vmem [thread:$0]  %s51, 512, %s259, [#allocation26], 128, 128, 8
    $region105: #{fwd.1} parent=1 // pred_fallthru
      _
    // Predicated region
    $region106: #{fwd.1} parent=1 // pred_check
      _
    $region107: #{fwd.1} parent=1 // pred_check_branch
      %266 = sbr.rel (0) target = $region109
    $region108: #{fwd.1} parent=1 // pred_region
      _
    $region109: #{fwd.1} parent=1 // pred_fallthru
      _
    // Predicated region
    $region110: #{fwd.1} parent=1 // pred_check
      _
    $region111: #{fwd.1} parent=1 // pred_check_branch
      %268 = sbr.rel (0) target = $region113
    $region112: #{fwd.1} parent=1 // pred_region
      %s270 = ssub.s32 512, 512
      %271 = vsyncadd [#allocation26], %s270
      %s272 = sshll.u32 [#allocation27], 4
      %s273 = int_to_ptr.vmem [resolvable:$true] %s272
      %278 = dma.hbm_to_vmem [thread:$0]  %s55, 512, %s273, [#allocation26], 128, 128, 8
    $region113: #{fwd.1} parent=1 // pred_fallthru
      _
    // Predicated region
    $region114: #{fwd.1} parent=1 // pred_check
      _
    $region115: #{fwd.1} parent=1 // pred_check_branch
      %280 = sbr.rel (0) target = $region117
    $region116: #{fwd.1} parent=1 // pred_region
      _
    $region117: #{fwd.1} parent=1 // pred_fallthru
      _
    // Predicated region
    $region118: #{fwd.1} parent=1 // pred_check
      _
    $region119: #{fwd.1} parent=1 // pred_check_branch
      %282 = sbr.rel (0) target = $region121
    $region120: #{fwd.1} parent=1 // pred_region
      %283 = dma.done [#allocation3], 256
    $region121: #{fwd.1} parent=1 // pred_fallthru
      _
    // Predicated region
    $region122: #{fwd.1} parent=1 // pred_check
      _
    $region123: #{fwd.1} parent=1 // pred_check_branch
      %285 = sbr.rel (0) target = $region125
    $region124: #{fwd.1} parent=1 // pred_region
      %286 = dma.done [#allocation5], 128
    $region125: #{fwd.1} parent=1 // pred_fallthru
      _
    // Predicated region
    $region126: #{fwd.1} parent=1 // pred_check
      _
    $region127: #{fwd.1} parent=1 // pred_check_branch
      %288 = sbr.rel (0) target = $region129
    $region128: #{fwd.1} parent=1 // pred_region
      %289 = dma.done [#allocation5], 32
    $region129: #{fwd.1} parent=1 // pred_fallthru
      _
    // Predicated region
    $region130: #{fwd.1} parent=1 // pred_check
      _
    $region131: #{fwd.1} parent=1 // pred_check_branch
      %291 = sbr.rel (0) target = $region133
    $region132: #{fwd.1} parent=1 // pred_region
      %292 = dma.done [#allocation8], 128
    $region133: #{fwd.1} parent=1 // pred_fallthru
      _
    // Predicated region
    $region134: #{fwd.1} parent=1 // pred_check
      _
    $region135: #{fwd.1} parent=1 // pred_check_branch
      %294 = sbr.rel (0) target = $region137
    $region136: #{fwd.1} parent=1 // pred_region
      %295 = dma.done [#allocation8], 16
    $region137: #{fwd.1} parent=1 // pred_fallthru
      _
    // Predicated region
    $region138: #{fwd.1} parent=1 // pred_check
      _
    $region139: #{fwd.1} parent=1 // pred_check_branch
      %297 = sbr.rel (0) target = $region141
    $region140: #{fwd.1} parent=1 // pred_region
      %298 = dma.done [#allocation11], 128
    $region141: #{fwd.1} parent=1 // pred_fallthru
      _
    // Predicated region
    $region142: #{fwd.1} parent=1 // pred_check
      _
    $region143: #{fwd.1} parent=1 // pred_check_branch
      %300 = sbr.rel (0) target = $region145
    $region144: #{fwd.1} parent=1 // pred_region
      %301 = dma.done [#allocation11], 16
    $region145: #{fwd.1} parent=1 // pred_fallthru
      _
    // Predicated region
    $region146: #{fwd.1} parent=1 // pred_check
      _
    $region147: #{fwd.1} parent=1 // pred_check_branch
      %303 = sbr.rel (0) target = $region149
    $region148: #{fwd.1} parent=1 // pred_region
      %304 = dma.done [#allocation14], 16
    $region149: #{fwd.1} parent=1 // pred_fallthru
      _
    // Predicated region
    $region150: #{fwd.1} parent=1 // pred_check
      _
    $region151: #{fwd.1} parent=1 // pred_check_branch
      %306 = sbr.rel (0) target = $region153
    $region152: #{fwd.1} parent=1 // pred_region
      %307 = dma.done [#allocation14], 16
    $region153: #{fwd.1} parent=1 // pred_fallthru
      _
    // Predicated region
    $region154: #{fwd.1} parent=1 // pred_check
      _
    $region155: #{fwd.1} parent=1 // pred_check_branch
      %309 = sbr.rel (0) target = $region157
    $region156: #{fwd.1} parent=1 // pred_region
      %310 = dma.done [#allocation17], 512
    $region157: #{fwd.1} parent=1 // pred_fallthru
      _
    // Predicated region
    $region158: #{fwd.1} parent=1 // pred_check
      _
    $region159: #{fwd.1} parent=1 // pred_check_branch
      %312 = sbr.rel (0) target = $region161
    $region160: #{fwd.1} parent=1 // pred_region
      %313 = dma.done [#allocation17], 16
    $region161: #{fwd.1} parent=1 // pred_fallthru
      _
    // Predicated region
    $region162: #{fwd.1} parent=1 // pred_check
      _
    $region163: #{fwd.1} parent=1 // pred_check_branch
      %315 = sbr.rel (0) target = $region165
    $region164: #{fwd.1} parent=1 // pred_region
      %316 = dma.done [#allocation20], 256
    $region165: #{fwd.1} parent=1 // pred_fallthru
      _
    // Predicated region
    $region166: #{fwd.1} parent=1 // pred_check
      _
    $region167: #{fwd.1} parent=1 // pred_check_branch
      %318 = sbr.rel (0) target = $region169
    $region168: #{fwd.1} parent=1 // pred_region
      %319 = dma.done [#allocation20], 16
    $region169: #{fwd.1} parent=1 // pred_fallthru
      _
    // Predicated region
    $region170: #{fwd.1} parent=1 // pred_check
      _
    $region171: #{fwd.1} parent=1 // pred_check_branch
      %321 = sbr.rel (0) target = $region173
    $region172: #{fwd.1} parent=1 // pred_region
      %322 = dma.done [#allocation23], 256
    $region173: #{fwd.1} parent=1 // pred_fallthru
      _
    // Predicated region
    $region174: #{fwd.1} parent=1 // pred_check
      _
    $region175: #{fwd.1} parent=1 // pred_check_branch
      %324 = sbr.rel (0) target = $region177
    $region176: #{fwd.1} parent=1 // pred_region
      %325 = dma.done [#allocation23], 256
    $region177: #{fwd.1} parent=1 // pred_fallthru
      _
    // Predicated region
    $region178: #{fwd.1} parent=1 // pred_check
      _
    $region179: #{fwd.1} parent=1 // pred_check_branch
      %327 = sbr.rel (0) target = $region181
    $region180: #{fwd.1} parent=1 // pred_region
      %328 = dma.done [#allocation26], 512
    $region181: #{fwd.1} parent=1 // pred_fallthru
      _
    // Predicated region
    $region182: #{fwd.1} parent=1 // pred_check
      _
    $region183: #{fwd.1} parent=1 // pred_check_branch
      %330 = sbr.rel (0) target = $region185
    $region184: #{fwd.1} parent=1 // pred_region
      %331 = dma.done [#allocation26], 512
    $region185: #{fwd.1} parent=1 // pred_fallthru
      _
    %v333 = vld [vmem:[#allocation2] sm:$0xff]
    %v334 = vld [vmem:[#allocation2 + $0x8] sm:$0xf]
    %v335 = vld [vmem:[%s3] sm:$0xff]
    %v336 = vld [vmem:[%s3 + $0x8] sm:$0xf]
    %v337 = vld [vmem:[#allocation4] sm:$0xff]
    %v338 = vld [vmem:[#allocation6] sm:$0x3]
    %v339 = vld [vmem:[%s9] sm:$0xff]
    %vm340 = vcmask 97280
    %v342 = vsel %vm340, %v337, 0
    %vm344 = vcmask 1043456
    %v346 = vsel %vm344, %v336, 0
    %348 = vmatprep.subr.mxu0 0.0
    %349 = vmatpush1.msra.mxu0 %v335
    %350 = vmatprep.subr.mxu0 0.0
    %351 = vmatpush1.msra.mxu0 %v346
    %352 = vmatprep.subr.mxu0 0.0
    %353 = vmatpush1.msra.mxu0 0.0
    %354 = vmatprep.subr.mxu0 0.0
    %355 = vmatpush1.msra.mxu0 0.0
    %356 = vmatprep.subr.mxu0 0.0
    %357 = vmatpush1.msra.mxu0 0.0
    %358 = vmatprep.subr.mxu0 0.0
    %359 = vmatpush1.msra.mxu0 0.0
    %360 = vmatprep.subr.mxu0 0.0
    %361 = vmatpush1.msra.mxu0 0.0
    %362 = vmatprep.subr.mxu0 0.0
    %363 = vmatpush1.msra.mxu0 0.0
    %364 = vmatprep.subr.mxu0 0.0
    %365 = vmatpush1.msra.mxu0 0.0
    %366 = vmatprep.subr.mxu0 0.0
    %367 = vmatpush1.msra.mxu0 0.0
    %368 = vmatprep.subr.mxu0 0.0
    %369 = vmatpush1.msra.mxu0 0.0
    %370 = vmatprep.subr.mxu0 0.0
    %371 = vmatpush1.msra.mxu0 0.0
    %372 = vmatprep.subr.mxu0 0.0
    %373 = vmatpush1.msra.mxu0 0.0
    %374 = vmatprep.subr.mxu0 0.0
    %375 = vmatpush1.msra.mxu0 0.0
    %376 = vmatprep.subr.mxu0 0.0
    %377 = vmatpush1.msra.mxu0 0.0
    %378 = vmatprep.subr.mxu0 0.0
    %379 = vmatpush1.msra.mxu0 0.0
    %380 = vmatprep.subr.mxu0 0.0
    %381 = vmatpush1.msra.mxu0 0.0
    %382 = vmatprep.subr.mxu0 0.0
    %383 = vmatpush1.msra.mxu0 0.0
    %384 = vmatprep.subr.mxu0 0.0
    %385 = vmatpush1.msra.mxu0 0.0
    %386 = vmatprep.subr.mxu0 0.0
    %387 = vmatpush1.msra.mxu0 0.0
    %388 = vmatprep.subr.mxu0 0.0
    %389 = vmatpush1.msra.mxu0 0.0
    %390 = vmatprep.subr.mxu0 0.0
    %391 = vmatpush1.msra.mxu0 0.0
    %392 = vmatprep.subr.mxu0 0.0
    %393 = vmatpush1.msra.mxu0 0.0
    %394 = vmatprep.subr.mxu0 0.0
    %395 = vmatpush1.msra.mxu0 0.0
    %396 = vmatprep.subr.mxu0 0.0
    %397 = vmatpush1.msra.mxu0 0.0
    %398 = vmatprep.subr.mxu0 0.0
    %399 = vmatpush1.msra.mxu0 0.0
    %400 = vmatprep.subr.mxu0 0.0
    %401 = vmatpush1.msra.mxu0 0.0
    %402 = vmatprep.subr.mxu0 0.0
    %403 = vmatpush1.msra.mxu0 0.0
    %404 = vmatprep.subr.mxu0 0.0
    %405 = vmatpush1.msra.mxu0 0.0
    %406 = vmatprep.subr.mxu0 0.0
    %407 = vmatpush1.msra.mxu0 0.0
    %408 = vmatprep.subr.mxu0 0.0
    %409 = vmatpush1.msra.mxu0 0.0
    %410 = vmatprep.subr.mxu0 0.0
    %411 = vmatpush1.msra.mxu0 0.0
    %412 = vmatprep.mubr.f32.mxu0 0.0
    %413 = vmatmul.mubr.f32.gmra.mrb[0].mxu0 %v342
    %v414 = vpop.f32.mrb[0].mxu0
    %v415 = vadd.f32 0.0, %v414
    %v416 = vpop.f32.mrb[0].mxu0
    %417 = vdwg.mxu0
    %v418 = vld [vmem:[#allocation10] sm:$0xff]
    %v419 = vld [vmem:[#allocation12] sm:$0x1]
    %v420 = vld [vmem:[%s23] sm:$0xff]
    %v421 = vld [vmem:[%s23 + $0x8] sm:$0xff]
    %v422 = vld [vmem:[%s23 + $0x10] sm:$0xff]
    %v423 = vld [vmem:[%s23 + $0x18] sm:$0xff]
    %v424 = vld [vmem:[%s25] sm:$0xff]
    %v425 = vld [vmem:[%s25 + $0x8] sm:$0xff]
    %v426 = vld [vmem:[%s25 + $0x10] sm:$0xff]
    %v427 = vld [vmem:[%s25 + $0x18] sm:$0xff]
    %v428 = vld [vmem:[#allocation13] sm:$0x1]
    %v429 = vpack.c.bf16 %v415, %v415
    %v430 = vpack.c.bf16 %v418, %v418
    %v432 = vlaneseq
    %v433 = vshrl.u32 %v432, 7
    %v434 = vsub.s32 0, %v433
    %v435 = vrot.slane %v419, %v434
    %vm437 = vcmask 64512
    %v439 = vsel %vm437, %v429, 0
    %v442 = vsel %vm344, %v430, 0
    %444 = vmatprep.subr.bf16.mxu0 0
    %445 = vmatpush1.bf16.msra.mxu0 %v442
    %446 = vmatprep.subr.bf16.mxu0 0
    %447 = vmatpush1.bf16.msra.mxu0 0
    %448 = vmatprep.subr.bf16.mxu0 0
    %449 = vmatpush1.bf16.msra.mxu0 0
    %450 = vmatprep.subr.bf16.mxu0 0
    %451 = vmatpush1.bf16.msra.mxu0 0
    %452 = vmatprep.subr.bf16.mxu0 0
    %453 = vmatpush1.bf16.msra.mxu0 0
    %454 = vmatprep.subr.bf16.mxu0 0
    %455 = vmatpush1.bf16.msra.mxu0 0
    %456 = vmatprep.subr.bf16.mxu0 0
    %457 = vmatpush1.bf16.msra.mxu0 0
    %458 = vmatprep.subr.bf16.mxu0 0
    %459 = vmatpush1.bf16.msra.mxu0 0
    %460 = vmatprep.subr.bf16.mxu0 0
    %461 = vmatpush1.bf16.msra.mxu0 0
    %462 = vmatprep.subr.bf16.mxu0 0
    %463 = vmatpush1.bf16.msra.mxu0 0
    %464 = vmatprep.subr.bf16.mxu0 0
    %465 = vmatpush1.bf16.msra.mxu0 0
    %466 = vmatprep.subr.bf16.mxu0 0
    %467 = vmatpush1.bf16.msra.mxu0 0
    %468 = vmatprep.subr.bf16.mxu0 0
    %469 = vmatpush1.bf16.msra.mxu0 0
    %470 = vmatprep.subr.bf16.mxu0 0
    %471 = vmatpush1.bf16.msra.mxu0 0
    %472 = vmatprep.subr.bf16.mxu0 0
    %473 = vmatpush1.bf16.msra.mxu0 0
    %474 = vmatprep.subr.bf16.mxu0 0
    %475 = vmatpush1.bf16.msra.mxu0 0
    %476 = vmatprep.mubr.bf16.mxu0 0
    %477 = vmatmul.mubr.bf16.gmra.mrb[0].mxu0 %v439
    %v478 = vpop.f32.mrb[0].mxu0
    %v479 = vadd.f32 %v435, %v478
    %v480 = vpop.f32.mrb[0].mxu0
    %v481 = vpop.f32.mrb[0].mxu0
    %v482 = vpop.f32.mrb[0].mxu0
    %483 = vdwg.mxu0
    %vm484 = vcmask 261120
    %v485 = vsel %vm484, %v479, -inf
    %486 = vmax.xlane.f32.xlu0 %v485
    %v487 = vpop.xlane.xlu0 %486
    %v488 = vsub.f32 %v479, %v487
    %v489 = vmul.f32 %v488, 1.442695
    %v490 = vpow.pop %v489
    %v491 = vsel %vm484, %v490, 0.0
    %492 = vadd.xlane.f32.xlu0 %v491
    %v493 = vpop.xlane.xlu0 %492
    %v494 = vrcp.pop %v493
    %v495 = vmul.f32 %v490, %v494
    %497 = vrot.lane.b32.xlu0 %v479, 96
    %v498 = vpop.permute.xlu0 %497
    %v500 = vmul.f32 %v495, %v498
    %v502 = vsel %vm437, %v338, 0
    %504 = vmatprep.subr.mxu0 0.0
    %505 = vmatpush1.msra.mxu0 %v500
    %506 = vmatprep.subr.mxu0 0.0
    %507 = vmatpush1.msra.mxu0 0.0
    %508 = vmatprep.subr.mxu0 0.0
    %509 = vmatpush1.msra.mxu0 0.0
    %510 = vmatprep.subr.mxu0 0.0
    %511 = vmatpush1.msra.mxu0 0.0
    %512 = vmatprep.subr.mxu0 0.0
    %513 = vmatpush1.msra.mxu0 0.0
    %514 = vmatprep.subr.mxu0 0.0
    %515 = vmatpush1.msra.mxu0 0.0
    %516 = vmatprep.subr.mxu0 0.0
    %517 = vmatpush1.msra.mxu0 0.0
    %518 = vmatprep.subr.mxu0 0.0
    %519 = vmatpush1.msra.mxu0 0.0
    %520 = vmatprep.subr.mxu0 0.0
    %521 = vmatpush1.msra.mxu0 0.0
    %522 = vmatprep.subr.mxu0 0.0
    %523 = vmatpush1.msra.mxu0 0.0
    %524 = vmatprep.subr.mxu0 0.0
    %525 = vmatpush1.msra.mxu0 0.0
    %526 = vmatprep.subr.mxu0 0.0
    %527 = vmatpush1.msra.mxu0 0.0
    %528 = vmatprep.subr.mxu0 0.0
    %529 = vmatpush1.msra.mxu0 0.0
    %530 = vmatprep.subr.mxu0 0.0
    %531 = vmatpush1.msra.mxu0 0.0
    %532 = vmatprep.subr.mxu0 0.0
    %533 = vmatpush1.msra.mxu0 0.0
    %534 = vmatprep.subr.mxu0 0.0
    %535 = vmatpush1.msra.mxu0 0.0
    %536 = vmatprep.subr.mxu0 0.0
    %537 = vmatpush1.msra.mxu0 0.0
    %538 = vmatprep.subr.mxu0 0.0
    %539 = vmatpush1.msra.mxu0 0.0
    %540 = vmatprep.subr.mxu0 0.0
    %541 = vmatpush1.msra.mxu0 0.0
    %542 = vmatprep.subr.mxu0 0.0
    %543 = vmatpush1.msra.mxu0 0.0
    %544 = vmatprep.subr.mxu0 0.0
    %545 = vmatpush1.msra.mxu0 0.0
    %546 = vmatprep.subr.mxu0 0.0
    %547 = vmatpush1.msra.mxu0 0.0
    %548 = vmatprep.subr.mxu0 0.0
    %549 = vmatpush1.msra.mxu0 0.0
    %550 = vmatprep.subr.mxu0 0.0
    %551 = vmatpush1.msra.mxu0 0.0
    %552 = vmatprep.subr.mxu0 0.0
    %553 = vmatpush1.msra.mxu0 0.0
    %554 = vmatprep.subr.mxu0 0.0
    %555 = vmatpush1.msra.mxu0 0.0
    %556 = vmatprep.subr.mxu0 0.0
    %557 = vmatpush1.msra.mxu0 0.0
    %558 = vmatprep.subr.mxu0 0.0
    %559 = vmatpush1.msra.mxu0 0.0
    %560 = vmatprep.subr.mxu0 0.0
    %561 = vmatpush1.msra.mxu0 0.0
    %562 = vmatprep.subr.mxu0 0.0
    %563 = vmatpush1.msra.mxu0 0.0
    %564 = vmatprep.subr.mxu0 0.0
    %565 = vmatpush1.msra.mxu0 0.0
    %566 = vmatprep.subr.mxu0 0.0
    %567 = vmatpush1.msra.mxu0 0.0
    %568 = vmatprep.mubr.f32.mxu0 0.0
    %569 = vmatmul.mubr.f32.gmra.mrb[0].mxu0 %v502
    %v570 = vpop.f32.mrb[0].mxu0
    %v571 = vadd.f32 0.0, %v570
    %v572 = vpop.f32.mrb[0].mxu0
    %573 = vdwg.mxu0
    %v574 = vpack.c.bf16 %v571, %v571
    %v575 = vpack.c.bf16 %v421, %v420
    %v576 = vpack.c.bf16 %v423, %v422
    %v577 = vpack.c.bf16 %v425, %v424
    %v578 = vpack.c.bf16 %v427, %v426
    %v580 = vsel %vm484, 0, 0
    %582 = vmatprep.subr.bf16.mxu0 0
    %583 = vmatpush1.bf16.msra.mxu0 %v577
    %584 = vmatprep.subr.bf16.mxu0 0
    %585 = vmatpush1.bf16.msra.mxu0 %v578
    %586 = vmatprep.subr.bf16.mxu0 0
    %587 = vmatpush1.bf16.msra.mxu0 0
    %588 = vmatprep.subr.bf16.mxu0 0
    %589 = vmatpush1.bf16.msra.mxu0 0
    %590 = vmatprep.subr.bf16.mxu0 0
    %591 = vmatpush1.bf16.msra.mxu0 0
    %592 = vmatprep.subr.bf16.mxu0 0
    %593 = vmatpush1.bf16.msra.mxu0 0
    %594 = vmatprep.subr.bf16.mxu0 0
    %595 = vmatpush1.bf16.msra.mxu0 0
    %596 = vmatprep.subr.bf16.mxu0 0
    %597 = vmatpush1.bf16.msra.mxu0 0
    %598 = vmatprep.subr.bf16.mxu0 0
    %599 = vmatpush1.bf16.msra.mxu0 0
    %600 = vmatprep.subr.bf16.mxu0 0
    %601 = vmatpush1.bf16.msra.mxu0 0
    %602 = vmatprep.subr.bf16.mxu0 0
    %603 = vmatpush1.bf16.msra.mxu0 0
    %604 = vmatprep.subr.bf16.mxu0 0
    %605 = vmatpush1.bf16.msra.mxu0 0
    %606 = vmatprep.subr.bf16.mxu0 0
    %607 = vmatpush1.bf16.msra.mxu0 0
    %608 = vmatprep.subr.bf16.mxu0 0
    %609 = vmatpush1.bf16.msra.mxu0 0
    %610 = vmatprep.subr.bf16.mxu0 0
    %611 = vmatpush1.bf16.msra.mxu0 0
    %612 = vmatprep.subr.bf16.mxu0 0
    %613 = vmatpush1.bf16.msra.mxu0 0
    %614 = vmatprep.mubr.bf16.mxu0 0
    %615 = vmatmul.mubr.bf16.gmra.mrb[0].mxu0 %v580
    %v616 = vpop.f32.mrb[0].mxu0
    %v617 = vadd.f32 0.0, %v616
    %v618 = vpop.f32.mrb[0].mxu0
    %v619 = vpop.f32.mrb[0].mxu0
    %v620 = vpop.f32.mrb[0].mxu0
    %621 = vdwg.mxu0
    %v623 = vsel %vm484, %v574, 0
    %625 = vmatprep.subr.bf16.mxu0 0
    %626 = vmatpush1.bf16.msra.mxu0 %v575
    %627 = vmatprep.subr.bf16.mxu0 0
    %628 = vmatpush1.bf16.msra.mxu0 %v576
    %629 = vmatprep.subr.bf16.mxu0 0
    %630 = vmatpush1.bf16.msra.mxu0 0
    %631 = vmatprep.subr.bf16.mxu0 0
    %632 = vmatpush1.bf16.msra.mxu0 0
    %633 = vmatprep.subr.bf16.mxu0 0
    %634 = vmatpush1.bf16.msra.mxu0 0
    %635 = vmatprep.subr.bf16.mxu0 0
    %636 = vmatpush1.bf16.msra.mxu0 0
    %637 = vmatprep.subr.bf16.mxu0 0
    %638 = vmatpush1.bf16.msra.mxu0 0
    %639 = vmatprep.subr.bf16.mxu0 0
    %640 = vmatpush1.bf16.msra.mxu0 0
    %641 = vmatprep.subr.bf16.mxu0 0
    %642 = vmatpush1.bf16.msra.mxu0 0
    %643 = vmatprep.subr.bf16.mxu0 0
    %644 = vmatpush1.bf16.msra.mxu0 0
    %645 = vmatprep.subr.bf16.mxu0 0
    %646 = vmatpush1.bf16.msra.mxu0 0
    %647 = vmatprep.subr.bf16.mxu0 0
    %648 = vmatpush1.bf16.msra.mxu0 0
    %649 = vmatprep.subr.bf16.mxu0 0
    %650 = vmatpush1.bf16.msra.mxu0 0
    %651 = vmatprep.subr.bf16.mxu0 0
    %652 = vmatpush1.bf16.msra.mxu0 0
    %653 = vmatprep.subr.bf16.mxu0 0
    %654 = vmatpush1.bf16.msra.mxu0 0
    %655 = vmatprep.subr.bf16.mxu0 0
    %656 = vmatpush1.bf16.msra.mxu0 0
    %657 = vmatprep.mubr.bf16.mxu0 0
    %658 = vmatmul.mubr.bf16.gmra.mrb[0].mxu0 %v623
    %v659 = vpop.f32.mrb[0].mxu0
    %v660 = vadd.f32 %v617, %v659
    %v661 = vpop.f32.mrb[0].mxu0
    %v662 = vpop.f32.mrb[0].mxu0
    %v663 = vpop.f32.mrb[0].mxu0
    %664 = vdwg.mxu0
    %v666 = vlaneseq
    %v667 = vshrl.u32 %v666, 7
    %v668 = vsub.s32 0, %v667
    %v669 = vrot.slane %v428, %v668
    %v671 = vadd.f32 %v660, %v669
    %v672 = vadd.f32 %v671, 0.0
    %v673 = vld [vmem:[#allocation7] sm:$0xff]
    %v674 = vpack.c.bf16 %v336, %v335
    %v675 = vpack.c.bf16 %v673, %v673
    %v677 = vsel %vm437, %v674, 0
    %v680 = vsel %vm344, %v675, 0
    %682 = vmatprep.subr.bf16.mxu0 0
    %683 = vmatpush1.bf16.msra.mxu0 %v680
    %684 = vmatprep.subr.bf16.mxu0 0
    %685 = vmatpush1.bf16.msra.mxu0 0
    %686 = vmatprep.subr.bf16.mxu0 0
    %687 = vmatpush1.bf16.msra.mxu0 0
    %688 = vmatprep.subr.bf16.mxu0 0
    %689 = vmatpush1.bf16.msra.mxu0 0
    %690 = vmatprep.subr.bf16.mxu0 0
    %691 = vmatpush1.bf16.msra.mxu0 0
    %692 = vmatprep.subr.bf16.mxu0 0
    %693 = vmatpush1.bf16.msra.mxu0 0
    %694 = vmatprep.subr.bf16.mxu0 0
    %695 = vmatpush1.bf16.msra.mxu0 0
    %696 = vmatprep.subr.bf16.mxu0 0
    %697 = vmatpush1.bf16.msra.mxu0 0
    %698 = vmatprep.subr.bf16.mxu0 0
    %699 = vmatpush1.bf16.msra.mxu0 0
    %700 = vmatprep.subr.bf16.mxu0 0
    %701 = vmatpush1.bf16.msra.mxu0 0
    %702 = vmatprep.subr.bf16.mxu0 0
    %703 = vmatpush1.bf16.msra.mxu0 0
    %704 = vmatprep.subr.bf16.mxu0 0
    %705 = vmatpush1.bf16.msra.mxu0 0
    %706 = vmatprep.subr.bf16.mxu0 0
    %707 = vmatpush1.bf16.msra.mxu0 0
    %708 = vmatprep.subr.bf16.mxu0 0
    %709 = vmatpush1.bf16.msra.mxu0 0
    %710 = vmatprep.subr.bf16.mxu0 0
    %711 = vmatpush1.bf16.msra.mxu0 0
    %712 = vmatprep.subr.bf16.mxu0 0
    %713 = vmatpush1.bf16.msra.mxu0 0
    %714 = vmatprep.mubr.bf16.mxu0 0
    %715 = vmatmul.mubr.bf16.gmra.mrb[0].mxu0 %v677
    %v716 = vpop.f32.mrb[0].mxu0
    %v717 = vadd.f32 0.0, %v716
    %v718 = vpop.f32.mrb[0].mxu0
    %v719 = vpop.f32.mrb[0].mxu0
    %v720 = vadd.f32 0.0, %v719
    %v721 = vpop.f32.mrb[0].mxu0
    %722 = vdwg.mxu0
    %v723 = vpack.c.bf16 %v334, %v333
    %v724 = vpack.c.bf16 %v720, %v717
    %v725 = vld [vmem:[%s13] sm:$0x1]
    %v727 = vlaneseq
    %v728 = vshrl.u32 %v727, 7
    %v729 = vsub.s32 0, %v728
    %v730 = vrot.slane %v725, %v729
    %v733 = vsel %vm340, %v723, 0
    %vm735 = vcmask 1045504
    %v737 = vsel %vm735, %v724, 0
    %739 = vmatprep.subr.bf16.mxu0 0
    %740 = vmatpush1.bf16.msra.mxu0 %v737
    %741 = vmatprep.subr.bf16.mxu0 0
    %742 = vmatpush1.bf16.msra.mxu0 0
    %743 = vmatprep.subr.bf16.mxu0 0
    %744 = vmatpush1.bf16.msra.mxu0 0
    %745 = vmatprep.subr.bf16.mxu0 0
    %746 = vmatpush1.bf16.msra.mxu0 0
    %747 = vmatprep.subr.bf16.mxu0 0
    %748 = vmatpush1.bf16.msra.mxu0 0
    %749 = vmatprep.subr.bf16.mxu0 0
    %750 = vmatpush1.bf16.msra.mxu0 0
    %751 = vmatprep.subr.bf16.mxu0 0
    %752 = vmatpush1.bf16.msra.mxu0 0
    %753 = vmatprep.subr.bf16.mxu0 0
    %754 = vmatpush1.bf16.msra.mxu0 0
    %755 = vmatprep.subr.bf16.mxu0 0
    %756 = vmatpush1.bf16.msra.mxu0 0
    %757 = vmatprep.subr.bf16.mxu0 0
    %758 = vmatpush1.bf16.msra.mxu0 0
    %759 = vmatprep.subr.bf16.mxu0 0
    %760 = vmatpush1.bf16.msra.mxu0 0
    %761 = vmatprep.subr.bf16.mxu0 0
    %762 = vmatpush1.bf16.msra.mxu0 0
    %763 = vmatprep.subr.bf16.mxu0 0
    %764 = vmatpush1.bf16.msra.mxu0 0
    %765 = vmatprep.subr.bf16.mxu0 0
    %766 = vmatpush1.bf16.msra.mxu0 0
    %767 = vmatprep.subr.bf16.mxu0 0
    %768 = vmatpush1.bf16.msra.mxu0 0
    %769 = vmatprep.subr.bf16.mxu0 0
    %770 = vmatpush1.bf16.msra.mxu0 0
    %771 = vmatprep.mubr.bf16.mxu0 0
    %772 = vmatmul.mubr.bf16.gmra.mrb[0].mxu0 %v733
    %v773 = vpop.f32.mrb[0].mxu0
    %v774 = vadd.f32 %v730, %v773
    %v775 = vpop.f32.mrb[0].mxu0
    %v776 = vpop.f32.mrb[0].mxu0
    %v777 = vadd.f32 %v730, %v776
    %v778 = vpop.f32.mrb[0].mxu0
    %779 = vdwg.mxu0
    %v780 = vmax.f32 %v774, 0.0
    %v781 = vmax.f32 %v777, 0.0
    %v783 = vsel %vm344, %v781, 0
    %785 = vmatprep.subr.mxu0 0.0
    %786 = vmatpush1.msra.mxu0 %v780
    %787 = vmatprep.subr.mxu0 0.0
    %788 = vmatpush1.msra.mxu0 %v783
    %789 = vmatprep.subr.mxu0 0.0
    %790 = vmatpush1.msra.mxu0 0.0
    %791 = vmatprep.subr.mxu0 0.0
    %792 = vmatpush1.msra.mxu0 0.0
    %793 = vmatprep.subr.mxu0 0.0
    %794 = vmatpush1.msra.mxu0 0.0
    %795 = vmatprep.subr.mxu0 0.0
    %796 = vmatpush1.msra.mxu0 0.0
    %797 = vmatprep.subr.mxu0 0.0
    %798 = vmatpush1.msra.mxu0 0.0
    %799 = vmatprep.subr.mxu0 0.0
    %800 = vmatpush1.msra.mxu0 0.0
    %801 = vmatprep.subr.mxu0 0.0
    %802 = vmatpush1.msra.mxu0 0.0
    %803 = vmatprep.subr.mxu0 0.0
    %804 = vmatpush1.msra.mxu0 0.0
    %805 = vmatprep.subr.mxu0 0.0
    %806 = vmatpush1.msra.mxu0 0.0
    %807 = vmatprep.subr.mxu0 0.0
    %808 = vmatpush1.msra.mxu0 0.0
    %809 = vmatprep.subr.mxu0 0.0
    %810 = vmatpush1.msra.mxu0 0.0
    %811 = vmatprep.subr.mxu0 0.0
    %812 = vmatpush1.msra.mxu0 0.0
    %813 = vmatprep.subr.mxu0 0.0
    %814 = vmatpush1.msra.mxu0 0.0
    %815 = vmatprep.subr.mxu0 0.0
    %816 = vmatpush1.msra.mxu0 0.0
    %817 = vmatprep.subr.mxu0 0.0
    %818 = vmatpush1.msra.mxu0 0.0
    %819 = vmatprep.subr.mxu0 0.0
    %820 = vmatpush1.msra.mxu0 0.0
    %821 = vmatprep.subr.mxu0 0.0
    %822 = vmatpush1.msra.mxu0 0.0
    %823 = vmatprep.subr.mxu0 0.0
    %824 = vmatpush1.msra.mxu0 0.0
    %825 = vmatprep.subr.mxu0 0.0
    %826 = vmatpush1.msra.mxu0 0.0
    %827 = vmatprep.subr.mxu0 0.0
    %828 = vmatpush1.msra.mxu0 0.0
    %829 = vmatprep.subr.mxu0 0.0
    %830 = vmatpush1.msra.mxu0 0.0
    %831 = vmatprep.subr.mxu0 0.0
    %832 = vmatpush1.msra.mxu0 0.0
    %833 = vmatprep.subr.mxu0 0.0
    %834 = vmatpush1.msra.mxu0 0.0
    %835 = vmatprep.subr.mxu0 0.0
    %836 = vmatpush1.msra.mxu0 0.0
    %837 = vmatprep.subr.mxu0 0.0
    %838 = vmatpush1.msra.mxu0 0.0
    %839 = vmatprep.subr.mxu0 0.0
    %840 = vmatpush1.msra.mxu0 0.0
    %841 = vmatprep.subr.mxu0 0.0
    %842 = vmatpush1.msra.mxu0 0.0
    %843 = vmatprep.subr.mxu0 0.0
    %844 = vmatpush1.msra.mxu0 0.0
    %845 = vmatprep.subr.mxu0 0.0
    %846 = vmatpush1.msra.mxu0 0.0
    %847 = vmatprep.subr.mxu0 0.0
    %848 = vmatpush1.msra.mxu0 0.0
    %849 = vmatprep.mubr.f32.mxu0 0.0
    %850 = vmatmul.mubr.f32.gmra.mrb[0].mxu0 %v342
    %v851 = vpop.f32.mrb[0].mxu0
    %v852 = vadd.f32 0.0, %v851
    %v853 = vpop.f32.mrb[0].mxu0
    %854 = vdwg.mxu0
    %v855 = vld [vmem:[%s29] sm:$0xff]
    %v856 = vld [vmem:[%s29 + $0x8] sm:$0xff]
    %v857 = vld [vmem:[%s29 + $0x10] sm:$0xff]
    %v858 = vld [vmem:[%s29 + $0x18] sm:$0xff]
    %v859 = vld [vmem:[#allocation15] sm:$0x1]
    %v860 = vld [vmem:[%s33] sm:$0xff]
    %v861 = vld [vmem:[%s33 + $0x8] sm:$0xff]
    %v862 = vld [vmem:[%s33 + $0x10] sm:$0xff]
    %v863 = vld [vmem:[%s33 + $0x18] sm:$0xff]
    %v864 = vld [vmem:[#allocation16] sm:$0xff]
    %v865 = vld [vmem:[#allocation16 + $0x8] sm:$0xff]
    %v866 = vld [vmem:[#allocation16 + $0x10] sm:$0xff]
    %v867 = vld [vmem:[#allocation16 + $0x18] sm:$0xff]
    %v868 = vld [vmem:[#allocation18] sm:$0x1]
    %v869 = vpack.c.bf16 %v852, %v852
    %v870 = vpack.c.bf16 %v856, %v855
    %v871 = vpack.c.bf16 %v858, %v857
    %v873 = vlaneseq
    %v874 = vshrl.u32 %v873, 7
    %v875 = vsub.s32 0, %v874
    %v876 = vrot.slane %v859, %v875
    %v879 = vsel %vm484, %v869, 0
    %881 = vmatprep.subr.bf16.mxu0 0
    %882 = vmatpush1.bf16.msra.mxu0 %v870
    %883 = vmatprep.subr.bf16.mxu0 0
    %884 = vmatpush1.bf16.msra.mxu0 %v871
    %885 = vmatprep.subr.bf16.mxu0 0
    %886 = vmatpush1.bf16.msra.mxu0 0
    %887 = vmatprep.subr.bf16.mxu0 0
    %888 = vmatpush1.bf16.msra.mxu0 0
    %889 = vmatprep.subr.bf16.mxu0 0
    %890 = vmatpush1.bf16.msra.mxu0 0
    %891 = vmatprep.subr.bf16.mxu0 0
    %892 = vmatpush1.bf16.msra.mxu0 0
    %893 = vmatprep.subr.bf16.mxu0 0
    %894 = vmatpush1.bf16.msra.mxu0 0
    %895 = vmatprep.subr.bf16.mxu0 0
    %896 = vmatpush1.bf16.msra.mxu0 0
    %897 = vmatprep.subr.bf16.mxu0 0
    %898 = vmatpush1.bf16.msra.mxu0 0
    %899 = vmatprep.subr.bf16.mxu0 0
    %900 = vmatpush1.bf16.msra.mxu0 0
    %901 = vmatprep.subr.bf16.mxu0 0
    %902 = vmatpush1.bf16.msra.mxu0 0
    %903 = vmatprep.subr.bf16.mxu0 0
    %904 = vmatpush1.bf16.msra.mxu0 0
    %905 = vmatprep.subr.bf16.mxu0 0
    %906 = vmatpush1.bf16.msra.mxu0 0
    %907 = vmatprep.subr.bf16.mxu0 0
    %908 = vmatpush1.bf16.msra.mxu0 0
    %909 = vmatprep.subr.bf16.mxu0 0
    %910 = vmatpush1.bf16.msra.mxu0 0
    %911 = vmatprep.subr.bf16.mxu0 0
    %912 = vmatpush1.bf16.msra.mxu0 0
    %913 = vmatprep.mubr.bf16.mxu0 0
    %914 = vmatmul.mubr.bf16.gmra.mrb[0].mxu0 %v879
    %v915 = vpop.f32.mrb[0].mxu0
    %v916 = vadd.f32 %v876, %v915
    %v917 = vpop.f32.mrb[0].mxu0
    %v918 = vpop.f32.mrb[0].mxu0
    %v919 = vpop.f32.mrb[0].mxu0
    %920 = vdwg.mxu0
    %v921 = vsel %vm484, %v916, -inf
    %922 = vmax.xlane.f32.xlu0 %v921
    %v923 = vpop.xlane.xlu0 %922
    %v924 = vsub.f32 %v916, %v923
    %v925 = vmul.f32 %v924, 1.442695
    %v926 = vpow.pop %v925
    %v927 = vsel %vm484, %v926, 0.0
    %928 = vadd.xlane.f32.xlu0 %v927
    %v929 = vpop.xlane.xlu0 %928
    %v930 = vrcp.pop %v929
    %v931 = vmul.f32 %v926, %v930
    %933 = vrot.lane.b32.xlu0 %v916, 96
    %v934 = vpop.permute.xlu0 %933
    %v936 = vmul.f32 %v931, %v934
    %937 = vmatprep.subr.mxu0 0.0
    %938 = vmatpush1.msra.mxu0 %v936
    %939 = vmatprep.subr.mxu0 0.0
    %940 = vmatpush1.msra.mxu0 0.0
    %941 = vmatprep.subr.mxu0 0.0
    %942 = vmatpush1.msra.mxu0 0.0
    %943 = vmatprep.subr.mxu0 0.0
    %944 = vmatpush1.msra.mxu0 0.0
    %945 = vmatprep.subr.mxu0 0.0
    %946 = vmatpush1.msra.mxu0 0.0
    %947 = vmatprep.subr.mxu0 0.0
    %948 = vmatpush1.msra.mxu0 0.0
    %949 = vmatprep.subr.mxu0 0.0
    %950 = vmatpush1.msra.mxu0 0.0
    %951 = vmatprep.subr.mxu0 0.0
    %952 = vmatpush1.msra.mxu0 0.0
    %953 = vmatprep.subr.mxu0 0.0
    %954 = vmatpush1.msra.mxu0 0.0
    %955 = vmatprep.subr.mxu0 0.0
    %956 = vmatpush1.msra.mxu0 0.0
    %957 = vmatprep.subr.mxu0 0.0
    %958 = vmatpush1.msra.mxu0 0.0
    %959 = vmatprep.subr.mxu0 0.0
    %960 = vmatpush1.msra.mxu0 0.0
    %961 = vmatprep.subr.mxu0 0.0
    %962 = vmatpush1.msra.mxu0 0.0
    %963 = vmatprep.subr.mxu0 0.0
    %964 = vmatpush1.msra.mxu0 0.0
    %965 = vmatprep.subr.mxu0 0.0
    %966 = vmatpush1.msra.mxu0 0.0
    %967 = vmatprep.subr.mxu0 0.0
    %968 = vmatpush1.msra.mxu0 0.0
    %969 = vmatprep.subr.mxu0 0.0
    %970 = vmatpush1.msra.mxu0 0.0
    %971 = vmatprep.subr.mxu0 0.0
    %972 = vmatpush1.msra.mxu0 0.0
    %973 = vmatprep.subr.mxu0 0.0
    %974 = vmatpush1.msra.mxu0 0.0
    %975 = vmatprep.subr.mxu0 0.0
    %976 = vmatpush1.msra.mxu0 0.0
    %977 = vmatprep.subr.mxu0 0.0
    %978 = vmatpush1.msra.mxu0 0.0
    %979 = vmatprep.subr.mxu0 0.0
    %980 = vmatpush1.msra.mxu0 0.0
    %981 = vmatprep.subr.mxu0 0.0
    %982 = vmatpush1.msra.mxu0 0.0
    %983 = vmatprep.subr.mxu0 0.0
    %984 = vmatpush1.msra.mxu0 0.0
    %985 = vmatprep.subr.mxu0 0.0
    %986 = vmatpush1.msra.mxu0 0.0
    %987 = vmatprep.subr.mxu0 0.0
    %988 = vmatpush1.msra.mxu0 0.0
    %989 = vmatprep.subr.mxu0 0.0
    %990 = vmatpush1.msra.mxu0 0.0
    %991 = vmatprep.subr.mxu0 0.0
    %992 = vmatpush1.msra.mxu0 0.0
    %993 = vmatprep.subr.mxu0 0.0
    %994 = vmatpush1.msra.mxu0 0.0
    %995 = vmatprep.subr.mxu0 0.0
    %996 = vmatpush1.msra.mxu0 0.0
    %997 = vmatprep.subr.mxu0 0.0
    %998 = vmatpush1.msra.mxu0 0.0
    %999 = vmatprep.subr.mxu0 0.0
    %1000 = vmatpush1.msra.mxu0 0.0
    %1001 = vmatprep.mubr.f32.mxu0 0.0
    %1002 = vmatmul.mubr.f32.gmra.mrb[0].mxu0 %v502
    %v1003 = vpop.f32.mrb[0].mxu0
    %v1004 = vadd.f32 0.0, %v1003
    %v1005 = vpop.f32.mrb[0].mxu0
    %1006 = vdwg.mxu0
    %v1007 = vpack.c.bf16 %v1004, %v1004
    %v1008 = vpack.c.bf16 %v861, %v860
    %v1009 = vpack.c.bf16 %v863, %v862
    %v1010 = vpack.c.bf16 %v672, %v672
    %v1011 = vpack.c.bf16 %v865, %v864
    %v1012 = vpack.c.bf16 %v867, %v866
    %v1014 = vsel %vm484, %v1010, 0
    %1016 = vmatprep.subr.bf16.mxu0 0
    %1017 = vmatpush1.bf16.msra.mxu0 %v1011
    %1018 = vmatprep.subr.bf16.mxu0 0
    %1019 = vmatpush1.bf16.msra.mxu0 %v1012
    %1020 = vmatprep.subr.bf16.mxu0 0
    %1021 = vmatpush1.bf16.msra.mxu0 0
    %1022 = vmatprep.subr.bf16.mxu0 0
    %1023 = vmatpush1.bf16.msra.mxu0 0
    %1024 = vmatprep.subr.bf16.mxu0 0
    %1025 = vmatpush1.bf16.msra.mxu0 0
    %1026 = vmatprep.subr.bf16.mxu0 0
    %1027 = vmatpush1.bf16.msra.mxu0 0
    %1028 = vmatprep.subr.bf16.mxu0 0
    %1029 = vmatpush1.bf16.msra.mxu0 0
    %1030 = vmatprep.subr.bf16.mxu0 0
    %1031 = vmatpush1.bf16.msra.mxu0 0
    %1032 = vmatprep.subr.bf16.mxu0 0
    %1033 = vmatpush1.bf16.msra.mxu0 0
    %1034 = vmatprep.subr.bf16.mxu0 0
    %1035 = vmatpush1.bf16.msra.mxu0 0
    %1036 = vmatprep.subr.bf16.mxu0 0
    %1037 = vmatpush1.bf16.msra.mxu0 0
    %1038 = vmatprep.subr.bf16.mxu0 0
    %1039 = vmatpush1.bf16.msra.mxu0 0
    %1040 = vmatprep.subr.bf16.mxu0 0
    %1041 = vmatpush1.bf16.msra.mxu0 0
    %1042 = vmatprep.subr.bf16.mxu0 0
    %1043 = vmatpush1.bf16.msra.mxu0 0
    %1044 = vmatprep.subr.bf16.mxu0 0
    %1045 = vmatpush1.bf16.msra.mxu0 0
    %1046 = vmatprep.subr.bf16.mxu0 0
    %1047 = vmatpush1.bf16.msra.mxu0 0
    %1048 = vmatprep.mubr.bf16.mxu0 0
    %1049 = vmatmul.mubr.bf16.gmra.mrb[0].mxu0 %v1014
    %v1050 = vpop.f32.mrb[0].mxu0
    %v1051 = vadd.f32 0.0, %v1050
    %v1052 = vpop.f32.mrb[0].mxu0
    %v1053 = vpop.f32.mrb[0].mxu0
    %v1054 = vpop.f32.mrb[0].mxu0
    %1055 = vdwg.mxu0
    %v1057 = vsel %vm484, %v1007, 0
    %1059 = vmatprep.subr.bf16.mxu0 0
    %1060 = vmatpush1.bf16.msra.mxu0 %v1008
    %1061 = vmatprep.subr.bf16.mxu0 0
    %1062 = vmatpush1.bf16.msra.mxu0 %v1009
    %1063 = vmatprep.subr.bf16.mxu0 0
    %1064 = vmatpush1.bf16.msra.mxu0 0
    %1065 = vmatprep.subr.bf16.mxu0 0
    %1066 = vmatpush1.bf16.msra.mxu0 0
    %1067 = vmatprep.subr.bf16.mxu0 0
    %1068 = vmatpush1.bf16.msra.mxu0 0
    %1069 = vmatprep.subr.bf16.mxu0 0
    %1070 = vmatpush1.bf16.msra.mxu0 0
    %1071 = vmatprep.subr.bf16.mxu0 0
    %1072 = vmatpush1.bf16.msra.mxu0 0
    %1073 = vmatprep.subr.bf16.mxu0 0
    %1074 = vmatpush1.bf16.msra.mxu0 0
    %1075 = vmatprep.subr.bf16.mxu0 0
    %1076 = vmatpush1.bf16.msra.mxu0 0
    %1077 = vmatprep.subr.bf16.mxu0 0
    %1078 = vmatpush1.bf16.msra.mxu0 0
    %1079 = vmatprep.subr.bf16.mxu0 0
    %1080 = vmatpush1.bf16.msra.mxu0 0
    %1081 = vmatprep.subr.bf16.mxu0 0
    %1082 = vmatpush1.bf16.msra.mxu0 0
    %1083 = vmatprep.subr.bf16.mxu0 0
    %1084 = vmatpush1.bf16.msra.mxu0 0
    %1085 = vmatprep.subr.bf16.mxu0 0
    %1086 = vmatpush1.bf16.msra.mxu0 0
    %1087 = vmatprep.subr.bf16.mxu0 0
    %1088 = vmatpush1.bf16.msra.mxu0 0
    %1089 = vmatprep.subr.bf16.mxu0 0
    %1090 = vmatpush1.bf16.msra.mxu0 0
    %1091 = vmatprep.mubr.bf16.mxu0 0
    %1092 = vmatmul.mubr.bf16.gmra.mrb[0].mxu0 %v1057
    %v1093 = vpop.f32.mrb[0].mxu0
    %v1094 = vadd.f32 %v1051, %v1093
    %v1095 = vpop.f32.mrb[0].mxu0
    %v1096 = vpop.f32.mrb[0].mxu0
    %v1097 = vpop.f32.mrb[0].mxu0
    %1098 = vdwg.mxu0
    %v1100 = vlaneseq
    %v1101 = vshrl.u32 %v1100, 7
    %v1102 = vsub.s32 0, %v1101
    %v1103 = vrot.slane %v868, %v1102
    %v1105 = vadd.f32 %v1094, %v1103
    %v1106 = vadd.f32 %v672, %v1105
    %v1107 = vld [vmem:[%s15] sm:$0xff]
    %v1108 = vld [vmem:[%s15 + $0x8] sm:$0xff]
    %v1109 = vld [vmem:[%s15 + $0x10] sm:$0xff]
    %v1110 = vld [vmem:[%s15 + $0x18] sm:$0xff]
    %v1111 = vpack.c.bf16 %v781, %v780
    %v1112 = vpack.c.bf16 %v1108, %v1107
    %v1113 = vpack.c.bf16 %v1110, %v1109
    %v1115 = vsel %vm484, %v1111, 0
    %1117 = vmatprep.subr.bf16.mxu0 0
    %1118 = vmatpush1.bf16.msra.mxu0 %v1112
    %1119 = vmatprep.subr.bf16.mxu0 0
    %1120 = vmatpush1.bf16.msra.mxu0 %v1113
    %1121 = vmatprep.subr.bf16.mxu0 0
    %1122 = vmatpush1.bf16.msra.mxu0 0
    %1123 = vmatprep.subr.bf16.mxu0 0
    %1124 = vmatpush1.bf16.msra.mxu0 0
    %1125 = vmatprep.subr.bf16.mxu0 0
    %1126 = vmatpush1.bf16.msra.mxu0 0
    %1127 = vmatprep.subr.bf16.mxu0 0
    %1128 = vmatpush1.bf16.msra.mxu0 0
    %1129 = vmatprep.subr.bf16.mxu0 0
    %1130 = vmatpush1.bf16.msra.mxu0 0
    %1131 = vmatprep.subr.bf16.mxu0 0
    %1132 = vmatpush1.bf16.msra.mxu0 0
    %1133 = vmatprep.subr.bf16.mxu0 0
    %1134 = vmatpush1.bf16.msra.mxu0 0
    %1135 = vmatprep.subr.bf16.mxu0 0
    %1136 = vmatpush1.bf16.msra.mxu0 0
    %1137 = vmatprep.subr.bf16.mxu0 0
    %1138 = vmatpush1.bf16.msra.mxu0 0
    %1139 = vmatprep.subr.bf16.mxu0 0
    %1140 = vmatpush1.bf16.msra.mxu0 0
    %1141 = vmatprep.subr.bf16.mxu0 0
    %1142 = vmatpush1.bf16.msra.mxu0 0
    %1143 = vmatprep.subr.bf16.mxu0 0
    %1144 = vmatpush1.bf16.msra.mxu0 0
    %1145 = vmatprep.subr.bf16.mxu0 0
    %1146 = vmatpush1.bf16.msra.mxu0 0
    %1147 = vmatprep.subr.bf16.mxu0 0
    %1148 = vmatpush1.bf16.msra.mxu0 0
    %1149 = vmatprep.mubr.bf16.mxu0 0
    %1150 = vmatmul.mubr.bf16.gmra.mrb[0].mxu0 %v1115
    %v1151 = vpop.f32.mrb[0].mxu0
    %v1152 = vadd.f32 0.0, %v1151
    %v1153 = vpop.f32.mrb[0].mxu0
    %v1154 = vpop.f32.mrb[0].mxu0
    %v1155 = vadd.f32 0.0, %v1154
    %v1156 = vpop.f32.mrb[0].mxu0
    %1157 = vdwg.mxu0
    %v1158 = vpack.c.bf16 %v1155, %v1152
    %v1159 = vld [vmem:[#allocation9] sm:$0x1]
    %v1161 = vlaneseq
    %v1162 = vshrl.u32 %v1161, 7
    %v1163 = vsub.s32 0, %v1162
    %v1164 = vrot.slane %v1159, %v1163
    %v1167 = vsel %vm735, %v1158, 0
    %1169 = vmatprep.subr.bf16.mxu0 0
    %1170 = vmatpush1.bf16.msra.mxu0 %v1167
    %1171 = vmatprep.subr.bf16.mxu0 0
    %1172 = vmatpush1.bf16.msra.mxu0 0
    %1173 = vmatprep.subr.bf16.mxu0 0
    %1174 = vmatpush1.bf16.msra.mxu0 0
    %1175 = vmatprep.subr.bf16.mxu0 0
    %1176 = vmatpush1.bf16.msra.mxu0 0
    %1177 = vmatprep.subr.bf16.mxu0 0
    %1178 = vmatpush1.bf16.msra.mxu0 0
    %1179 = vmatprep.subr.bf16.mxu0 0
    %1180 = vmatpush1.bf16.msra.mxu0 0
    %1181 = vmatprep.subr.bf16.mxu0 0
    %1182 = vmatpush1.bf16.msra.mxu0 0
    %1183 = vmatprep.subr.bf16.mxu0 0
    %1184 = vmatpush1.bf16.msra.mxu0 0
    %1185 = vmatprep.subr.bf16.mxu0 0
    %1186 = vmatpush1.bf16.msra.mxu0 0
    %1187 = vmatprep.subr.bf16.mxu0 0
    %1188 = vmatpush1.bf16.msra.mxu0 0
    %1189 = vmatprep.subr.bf16.mxu0 0
    %1190 = vmatpush1.bf16.msra.mxu0 0
    %1191 = vmatprep.subr.bf16.mxu0 0
    %1192 = vmatpush1.bf16.msra.mxu0 0
    %1193 = vmatprep.subr.bf16.mxu0 0
    %1194 = vmatpush1.bf16.msra.mxu0 0
    %1195 = vmatprep.subr.bf16.mxu0 0
    %1196 = vmatpush1.bf16.msra.mxu0 0
    %1197 = vmatprep.subr.bf16.mxu0 0
    %1198 = vmatpush1.bf16.msra.mxu0 0
    %1199 = vmatprep.subr.bf16.mxu0 0
    %1200 = vmatpush1.bf16.msra.mxu0 0
    %1201 = vmatprep.mubr.bf16.mxu0 0
    %1202 = vmatmul.mubr.bf16.gmra.mrb[0].mxu0 %v733
    %v1203 = vpop.f32.mrb[0].mxu0
    %v1204 = vadd.f32 %v1164, %v1203
    %v1205 = vpop.f32.mrb[0].mxu0
    %v1206 = vpop.f32.mrb[0].mxu0
    %v1207 = vadd.f32 %v1164, %v1206
    %v1208 = vpop.f32.mrb[0].mxu0
    %1209 = vdwg.mxu0
    %v1210 = vmax.f32 %v1204, 0.0
    %v1211 = vmax.f32 %v1207, 0.0
    %v1213 = vsel %vm344, %v1211, 0
    %1215 = vmatprep.subr.mxu0 0.0
    %1216 = vmatpush1.msra.mxu0 %v1210
    %1217 = vmatprep.subr.mxu0 0.0
    %1218 = vmatpush1.msra.mxu0 %v1213
    %1219 = vmatprep.subr.mxu0 0.0
    %1220 = vmatpush1.msra.mxu0 0.0
    %1221 = vmatprep.subr.mxu0 0.0
    %1222 = vmatpush1.msra.mxu0 0.0
    %1223 = vmatprep.subr.mxu0 0.0
    %1224 = vmatpush1.msra.mxu0 0.0
    %1225 = vmatprep.subr.mxu0 0.0
    %1226 = vmatpush1.msra.mxu0 0.0
    %1227 = vmatprep.subr.mxu0 0.0
    %1228 = vmatpush1.msra.mxu0 0.0
    %1229 = vmatprep.subr.mxu0 0.0
    %1230 = vmatpush1.msra.mxu0 0.0
    %1231 = vmatprep.subr.mxu0 0.0
    %1232 = vmatpush1.msra.mxu0 0.0
    %1233 = vmatprep.subr.mxu0 0.0
    %1234 = vmatpush1.msra.mxu0 0.0
    %1235 = vmatprep.subr.mxu0 0.0
    %1236 = vmatpush1.msra.mxu0 0.0
    %1237 = vmatprep.subr.mxu0 0.0
    %1238 = vmatpush1.msra.mxu0 0.0
    %1239 = vmatprep.subr.mxu0 0.0
    %1240 = vmatpush1.msra.mxu0 0.0
    %1241 = vmatprep.subr.mxu0 0.0
    %1242 = vmatpush1.msra.mxu0 0.0
    %1243 = vmatprep.subr.mxu0 0.0
    %1244 = vmatpush1.msra.mxu0 0.0
    %1245 = vmatprep.subr.mxu0 0.0
    %1246 = vmatpush1.msra.mxu0 0.0
    %1247 = vmatprep.subr.mxu0 0.0
    %1248 = vmatpush1.msra.mxu0 0.0
    %1249 = vmatprep.subr.mxu0 0.0
    %1250 = vmatpush1.msra.mxu0 0.0
    %1251 = vmatprep.subr.mxu0 0.0
    %1252 = vmatpush1.msra.mxu0 0.0
    %1253 = vmatprep.subr.mxu0 0.0
    %1254 = vmatpush1.msra.mxu0 0.0
    %1255 = vmatprep.subr.mxu0 0.0
    %1256 = vmatpush1.msra.mxu0 0.0
    %1257 = vmatprep.subr.mxu0 0.0
    %1258 = vmatpush1.msra.mxu0 0.0
    %1259 = vmatprep.subr.mxu0 0.0
    %1260 = vmatpush1.msra.mxu0 0.0
    %1261 = vmatprep.subr.mxu0 0.0
    %1262 = vmatpush1.msra.mxu0 0.0
    %1263 = vmatprep.subr.mxu0 0.0
    %1264 = vmatpush1.msra.mxu0 0.0
    %1265 = vmatprep.subr.mxu0 0.0
    %1266 = vmatpush1.msra.mxu0 0.0
    %1267 = vmatprep.subr.mxu0 0.0
    %1268 = vmatpush1.msra.mxu0 0.0
    %1269 = vmatprep.subr.mxu0 0.0
    %1270 = vmatpush1.msra.mxu0 0.0
    %1271 = vmatprep.subr.mxu0 0.0
    %1272 = vmatpush1.msra.mxu0 0.0
    %1273 = vmatprep.subr.mxu0 0.0
    %1274 = vmatpush1.msra.mxu0 0.0
    %1275 = vmatprep.subr.mxu0 0.0
    %1276 = vmatpush1.msra.mxu0 0.0
    %1277 = vmatprep.subr.mxu0 0.0
    %1278 = vmatpush1.msra.mxu0 0.0
    %1279 = vmatprep.mubr.f32.mxu0 0.0
    %1280 = vmatmul.mubr.f32.gmra.mrb[0].mxu0 %v342
    %v1281 = vpop.f32.mrb[0].mxu0
    %v1282 = vadd.f32 0.0, %v1281
    %v1283 = vpop.f32.mrb[0].mxu0
    %1284 = vdwg.mxu0
    %v1285 = vld [vmem:[#allocation19] sm:$0xff]
    %v1286 = vld [vmem:[#allocation19 + $0x8] sm:$0xff]
    %v1287 = vld [vmem:[#allocation21] sm:$0x1]
    %v1288 = vld [vmem:[#allocation22] sm:$0xff]
    %v1289 = vld [vmem:[#allocation22 + $0x8] sm:$0xff]
    %v1290 = vld [vmem:[%s45] sm:$0xff]
    %v1291 = vld [vmem:[%s45 + $0x8] sm:$0xff]
    %v1292 = vld [vmem:[%s45 + $0x10] sm:$0xff]
    %v1293 = vld [vmem:[%s45 + $0x18] sm:$0xff]
    %v1294 = vld [vmem:[%s47] sm:$0x1]
    %v1295 = vpack.c.bf16 %v1282, %v1282
    %v1296 = vpack.c.bf16 %v1286, %v1285
    %v1298 = vlaneseq
    %v1299 = vshrl.u32 %v1298, 7
    %v1300 = vsub.s32 0, %v1299
    %v1301 = vrot.slane %v1287, %v1300
    %vm1303 = vcmask 130048
    %v1305 = vsel %vm1303, %v1295, 0
    %1307 = vmatprep.subr.bf16.mxu0 0
    %1308 = vmatpush1.bf16.msra.mxu0 %v1296
    %1309 = vmatprep.subr.bf16.mxu0 0
    %1310 = vmatpush1.bf16.msra.mxu0 0
    %1311 = vmatprep.subr.bf16.mxu0 0
    %1312 = vmatpush1.bf16.msra.mxu0 0
    %1313 = vmatprep.subr.bf16.mxu0 0
    %1314 = vmatpush1.bf16.msra.mxu0 0
    %1315 = vmatprep.subr.bf16.mxu0 0
    %1316 = vmatpush1.bf16.msra.mxu0 0
    %1317 = vmatprep.subr.bf16.mxu0 0
    %1318 = vmatpush1.bf16.msra.mxu0 0
    %1319 = vmatprep.subr.bf16.mxu0 0
    %1320 = vmatpush1.bf16.msra.mxu0 0
    %1321 = vmatprep.subr.bf16.mxu0 0
    %1322 = vmatpush1.bf16.msra.mxu0 0
    %1323 = vmatprep.subr.bf16.mxu0 0
    %1324 = vmatpush1.bf16.msra.mxu0 0
    %1325 = vmatprep.subr.bf16.mxu0 0
    %1326 = vmatpush1.bf16.msra.mxu0 0
    %1327 = vmatprep.subr.bf16.mxu0 0
    %1328 = vmatpush1.bf16.msra.mxu0 0
    %1329 = vmatprep.subr.bf16.mxu0 0
    %1330 = vmatpush1.bf16.msra.mxu0 0
    %1331 = vmatprep.subr.bf16.mxu0 0
    %1332 = vmatpush1.bf16.msra.mxu0 0
    %1333 = vmatprep.subr.bf16.mxu0 0
    %1334 = vmatpush1.bf16.msra.mxu0 0
    %1335 = vmatprep.subr.bf16.mxu0 0
    %1336 = vmatpush1.bf16.msra.mxu0 0
    %1337 = vmatprep.subr.bf16.mxu0 0
    %1338 = vmatpush1.bf16.msra.mxu0 0
    %1339 = vmatprep.mubr.bf16.mxu0 0
    %1340 = vmatmul.mubr.bf16.gmra.mrb[0].mxu0 %v1305
    %v1341 = vpop.f32.mrb[0].mxu0
    %v1342 = vadd.f32 %v1301, %v1341
    %v1343 = vpop.f32.mrb[0].mxu0
    %v1344 = vpop.f32.mrb[0].mxu0
    %v1345 = vpop.f32.mrb[0].mxu0
    %1346 = vdwg.mxu0
    %v1347 = vsel %vm1303, %v1342, -inf
    %1348 = vmax.xlane.f32.xlu0 %v1347
    %v1349 = vpop.xlane.xlu0 %1348
    %v1350 = vsub.f32 %v1342, %v1349
    %v1351 = vmul.f32 %v1350, 1.442695
    %v1352 = vpow.pop %v1351
    %v1353 = vsel %vm1303, %v1352, 0.0
    %1354 = vadd.xlane.f32.xlu0 %v1353
    %v1355 = vpop.xlane.xlu0 %1354
    %v1356 = vrcp.pop %v1355
    %v1357 = vmul.f32 %v1352, %v1356
    %1359 = vrot.lane.b32.xlu0 %v1342, 112
    %v1360 = vpop.permute.xlu0 %1359
    %v1362 = vmul.f32 %v1357, %v1360
    %1363 = vmatprep.subr.mxu0 0.0
    %1364 = vmatpush1.msra.mxu0 %v1362
    %1365 = vmatprep.subr.mxu0 0.0
    %1366 = vmatpush1.msra.mxu0 0.0
    %1367 = vmatprep.subr.mxu0 0.0
    %1368 = vmatpush1.msra.mxu0 0.0
    %1369 = vmatprep.subr.mxu0 0.0
    %1370 = vmatpush1.msra.mxu0 0.0
    %1371 = vmatprep.subr.mxu0 0.0
    %1372 = vmatpush1.msra.mxu0 0.0
    %1373 = vmatprep.subr.mxu0 0.0
    %1374 = vmatpush1.msra.mxu0 0.0
    %1375 = vmatprep.subr.mxu0 0.0
    %1376 = vmatpush1.msra.mxu0 0.0
    %1377 = vmatprep.subr.mxu0 0.0
    %1378 = vmatpush1.msra.mxu0 0.0
    %1379 = vmatprep.subr.mxu0 0.0
    %1380 = vmatpush1.msra.mxu0 0.0
    %1381 = vmatprep.subr.mxu0 0.0
    %1382 = vmatpush1.msra.mxu0 0.0
    %1383 = vmatprep.subr.mxu0 0.0
    %1384 = vmatpush1.msra.mxu0 0.0
    %1385 = vmatprep.subr.mxu0 0.0
    %1386 = vmatpush1.msra.mxu0 0.0
    %1387 = vmatprep.subr.mxu0 0.0
    %1388 = vmatpush1.msra.mxu0 0.0
    %1389 = vmatprep.subr.mxu0 0.0
    %1390 = vmatpush1.msra.mxu0 0.0
    %1391 = vmatprep.subr.mxu0 0.0
    %1392 = vmatpush1.msra.mxu0 0.0
    %1393 = vmatprep.subr.mxu0 0.0
    %1394 = vmatpush1.msra.mxu0 0.0
    %1395 = vmatprep.subr.mxu0 0.0
    %1396 = vmatpush1.msra.mxu0 0.0
    %1397 = vmatprep.subr.mxu0 0.0
    %1398 = vmatpush1.msra.mxu0 0.0
    %1399 = vmatprep.subr.mxu0 0.0
    %1400 = vmatpush1.msra.mxu0 0.0
    %1401 = vmatprep.subr.mxu0 0.0
    %1402 = vmatpush1.msra.mxu0 0.0
    %1403 = vmatprep.subr.mxu0 0.0
    %1404 = vmatpush1.msra.mxu0 0.0
    %1405 = vmatprep.subr.mxu0 0.0
    %1406 = vmatpush1.msra.mxu0 0.0
    %1407 = vmatprep.subr.mxu0 0.0
    %1408 = vmatpush1.msra.mxu0 0.0
    %1409 = vmatprep.subr.mxu0 0.0
    %1410 = vmatpush1.msra.mxu0 0.0
    %1411 = vmatprep.subr.mxu0 0.0
    %1412 = vmatpush1.msra.mxu0 0.0
    %1413 = vmatprep.subr.mxu0 0.0
    %1414 = vmatpush1.msra.mxu0 0.0
    %1415 = vmatprep.subr.mxu0 0.0
    %1416 = vmatpush1.msra.mxu0 0.0
    %1417 = vmatprep.subr.mxu0 0.0
    %1418 = vmatpush1.msra.mxu0 0.0
    %1419 = vmatprep.subr.mxu0 0.0
    %1420 = vmatpush1.msra.mxu0 0.0
    %1421 = vmatprep.subr.mxu0 0.0
    %1422 = vmatpush1.msra.mxu0 0.0
    %1423 = vmatprep.subr.mxu0 0.0
    %1424 = vmatpush1.msra.mxu0 0.0
    %1425 = vmatprep.subr.mxu0 0.0
    %1426 = vmatpush1.msra.mxu0 0.0
    %1427 = vmatprep.mubr.f32.mxu0 0.0
    %1428 = vmatmul.mubr.f32.gmra.mrb[0].mxu0 %v502
    %v1429 = vpop.f32.mrb[0].mxu0
    %v1430 = vadd.f32 0.0, %v1429
    %v1431 = vpop.f32.mrb[0].mxu0
    %1432 = vdwg.mxu0
    %v1433 = vpack.c.bf16 %v1430, %v1430
    %v1434 = vpack.c.bf16 %v1289, %v1288
    %v1435 = vpack.c.bf16 %v1106, %v1106
    %v1436 = vpack.c.bf16 %v1291, %v1290
    %v1437 = vpack.c.bf16 %v1293, %v1292
    %v1439 = vsel %vm484, %v1435, 0
    %1441 = vmatprep.subr.bf16.mxu0 0
    %1442 = vmatpush1.bf16.msra.mxu0 %v1436
    %1443 = vmatprep.subr.bf16.mxu0 0
    %1444 = vmatpush1.bf16.msra.mxu0 %v1437
    %1445 = vmatprep.subr.bf16.mxu0 0
    %1446 = vmatpush1.bf16.msra.mxu0 0
    %1447 = vmatprep.subr.bf16.mxu0 0
    %1448 = vmatpush1.bf16.msra.mxu0 0
    %1449 = vmatprep.subr.bf16.mxu0 0
    %1450 = vmatpush1.bf16.msra.mxu0 0
    %1451 = vmatprep.subr.bf16.mxu0 0
    %1452 = vmatpush1.bf16.msra.mxu0 0
    %1453 = vmatprep.subr.bf16.mxu0 0
    %1454 = vmatpush1.bf16.msra.mxu0 0
    %1455 = vmatprep.subr.bf16.mxu0 0
    %1456 = vmatpush1.bf16.msra.mxu0 0
    %1457 = vmatprep.subr.bf16.mxu0 0
    %1458 = vmatpush1.bf16.msra.mxu0 0
    %1459 = vmatprep.subr.bf16.mxu0 0
    %1460 = vmatpush1.bf16.msra.mxu0 0
    %1461 = vmatprep.subr.bf16.mxu0 0
    %1462 = vmatpush1.bf16.msra.mxu0 0
    %1463 = vmatprep.subr.bf16.mxu0 0
    %1464 = vmatpush1.bf16.msra.mxu0 0
    %1465 = vmatprep.subr.bf16.mxu0 0
    %1466 = vmatpush1.bf16.msra.mxu0 0
    %1467 = vmatprep.subr.bf16.mxu0 0
    %1468 = vmatpush1.bf16.msra.mxu0 0
    %1469 = vmatprep.subr.bf16.mxu0 0
    %1470 = vmatpush1.bf16.msra.mxu0 0
    %1471 = vmatprep.subr.bf16.mxu0 0
    %1472 = vmatpush1.bf16.msra.mxu0 0
    %1473 = vmatprep.mubr.bf16.mxu0 0
    %1474 = vmatmul.mubr.bf16.gmra.mrb[0].mxu0 %v1439
    %v1475 = vpop.f32.mrb[0].mxu0
    %v1476 = vadd.f32 0.0, %v1475
    %v1477 = vpop.f32.mrb[0].mxu0
    %v1478 = vpop.f32.mrb[0].mxu0
    %v1479 = vpop.f32.mrb[0].mxu0
    %1480 = vdwg.mxu0
    %v1482 = vsel %vm1303, %v1433, 0
    %1484 = vmatprep.subr.bf16.mxu0 0
    %1485 = vmatpush1.bf16.msra.mxu0 %v1434
    %1486 = vmatprep.subr.bf16.mxu0 0
    %1487 = vmatpush1.bf16.msra.mxu0 0
    %1488 = vmatprep.subr.bf16.mxu0 0
    %1489 = vmatpush1.bf16.msra.mxu0 0
    %1490 = vmatprep.subr.bf16.mxu0 0
    %1491 = vmatpush1.bf16.msra.mxu0 0
    %1492 = vmatprep.subr.bf16.mxu0 0
    %1493 = vmatpush1.bf16.msra.mxu0 0
    %1494 = vmatprep.subr.bf16.mxu0 0
    %1495 = vmatpush1.bf16.msra.mxu0 0
    %1496 = vmatprep.subr.bf16.mxu0 0
    %1497 = vmatpush1.bf16.msra.mxu0 0
    %1498 = vmatprep.subr.bf16.mxu0 0
    %1499 = vmatpush1.bf16.msra.mxu0 0
    %1500 = vmatprep.subr.bf16.mxu0 0
    %1501 = vmatpush1.bf16.msra.mxu0 0
    %1502 = vmatprep.subr.bf16.mxu0 0
    %1503 = vmatpush1.bf16.msra.mxu0 0
    %1504 = vmatprep.subr.bf16.mxu0 0
    %1505 = vmatpush1.bf16.msra.mxu0 0
    %1506 = vmatprep.subr.bf16.mxu0 0
    %1507 = vmatpush1.bf16.msra.mxu0 0
    %1508 = vmatprep.subr.bf16.mxu0 0
    %1509 = vmatpush1.bf16.msra.mxu0 0
    %1510 = vmatprep.subr.bf16.mxu0 0
    %1511 = vmatpush1.bf16.msra.mxu0 0
    %1512 = vmatprep.subr.bf16.mxu0 0
    %1513 = vmatpush1.bf16.msra.mxu0 0
    %1514 = vmatprep.subr.bf16.mxu0 0
    %1515 = vmatpush1.bf16.msra.mxu0 0
    %1516 = vmatprep.mubr.bf16.mxu0 0
    %1517 = vmatmul.mubr.bf16.gmra.mrb[0].mxu0 %v1482
    %v1518 = vpop.f32.mrb[0].mxu0
    %v1519 = vadd.f32 %v1476, %v1518
    %v1520 = vpop.f32.mrb[0].mxu0
    %v1521 = vpop.f32.mrb[0].mxu0
    %v1522 = vpop.f32.mrb[0].mxu0
    %1523 = vdwg.mxu0
    %v1525 = vlaneseq
    %v1526 = vshrl.u32 %v1525, 7
    %v1527 = vsub.s32 0, %v1526
    %v1528 = vrot.slane %v1294, %v1527
    %v1530 = vadd.f32 %v1519, %v1528
    %v1531 = vadd.f32 %v1106, %v1530
    %vm1532 = vcmask 15360
    %v1534 = vsel %vm1532, %v339, 0
    %vm1536 = vcmask 1041408
    %v1538 = vsel %vm1536, %v1531, 0
    %1540 = vmatprep.subr.mxu0 0.0
    %1541 = vmatpush1.msra.mxu0 %v1538
    %1542 = vmatprep.subr.mxu0 0.0
    %1543 = vmatpush1.msra.mxu0 0.0
    %1544 = vmatprep.subr.mxu0 0.0
    %1545 = vmatpush1.msra.mxu0 0.0
    %1546 = vmatprep.subr.mxu0 0.0
    %1547 = vmatpush1.msra.mxu0 0.0
    %1548 = vmatprep.subr.mxu0 0.0
    %1549 = vmatpush1.msra.mxu0 0.0
    %1550 = vmatprep.subr.mxu0 0.0
    %1551 = vmatpush1.msra.mxu0 0.0
    %1552 = vmatprep.subr.mxu0 0.0
    %1553 = vmatpush1.msra.mxu0 0.0
    %1554 = vmatprep.subr.mxu0 0.0
    %1555 = vmatpush1.msra.mxu0 0.0
    %1556 = vmatprep.subr.mxu0 0.0
    %1557 = vmatpush1.msra.mxu0 0.0
    %1558 = vmatprep.subr.mxu0 0.0
    %1559 = vmatpush1.msra.mxu0 0.0
    %1560 = vmatprep.subr.mxu0 0.0
    %1561 = vmatpush1.msra.mxu0 0.0
    %1562 = vmatprep.subr.mxu0 0.0
    %1563 = vmatpush1.msra.mxu0 0.0
    %1564 = vmatprep.subr.mxu0 0.0
    %1565 = vmatpush1.msra.mxu0 0.0
    %1566 = vmatprep.subr.mxu0 0.0
    %1567 = vmatpush1.msra.mxu0 0.0
    %1568 = vmatprep.subr.mxu0 0.0
    %1569 = vmatpush1.msra.mxu0 0.0
    %1570 = vmatprep.subr.mxu0 0.0
    %1571 = vmatpush1.msra.mxu0 0.0
    %1572 = vmatprep.subr.mxu0 0.0
    %1573 = vmatpush1.msra.mxu0 0.0
    %1574 = vmatprep.subr.mxu0 0.0
    %1575 = vmatpush1.msra.mxu0 0.0
    %1576 = vmatprep.subr.mxu0 0.0
    %1577 = vmatpush1.msra.mxu0 0.0
    %1578 = vmatprep.subr.mxu0 0.0
    %1579 = vmatpush1.msra.mxu0 0.0
    %1580 = vmatprep.subr.mxu0 0.0
    %1581 = vmatpush1.msra.mxu0 0.0
    %1582 = vmatprep.subr.mxu0 0.0
    %1583 = vmatpush1.msra.mxu0 0.0
    %1584 = vmatprep.subr.mxu0 0.0
    %1585 = vmatpush1.msra.mxu0 0.0
    %1586 = vmatprep.subr.mxu0 0.0
    %1587 = vmatpush1.msra.mxu0 0.0
    %1588 = vmatprep.subr.mxu0 0.0
    %1589 = vmatpush1.msra.mxu0 0.0
    %1590 = vmatprep.subr.mxu0 0.0
    %1591 = vmatpush1.msra.mxu0 0.0
    %1592 = vmatprep.subr.mxu0 0.0
    %1593 = vmatpush1.msra.mxu0 0.0
    %1594 = vmatprep.subr.mxu0 0.0
    %1595 = vmatpush1.msra.mxu0 0.0
    %1596 = vmatprep.subr.mxu0 0.0
    %1597 = vmatpush1.msra.mxu0 0.0
    %1598 = vmatprep.subr.mxu0 0.0
    %1599 = vmatpush1.msra.mxu0 0.0
    %1600 = vmatprep.subr.mxu0 0.0
    %1601 = vmatpush1.msra.mxu0 0.0
    %1602 = vmatprep.subr.mxu0 0.0
    %1603 = vmatpush1.msra.mxu0 0.0
    %1604 = vmatprep.mubr.f32.mxu0 0.0
    %1605 = vmatmul.mubr.f32.gmra.mrb[0].mxu0 %v1534
    %v1606 = vpop.f32.mrb[0].mxu0
    %v1607 = vadd.f32 0.0, %v1606
    %v1608 = vpop.f32.mrb[0].mxu0
    %1609 = vdwg.mxu0
    %v1610 = vld [vmem:[#allocation24] sm:$0xff]
    %v1611 = vld [vmem:[#allocation24 + $0x8] sm:$0xff]
    %v1612 = vpack.c.bf16 %v1611, %v1610
    %v1613 = vld [vmem:[#allocation25] sm:$0xff]
    %v1614 = vld [vmem:[#allocation25 + $0x8] sm:$0xff]
    %v1615 = vld [vmem:[#allocation25 + $0x10] sm:$0xff]
    %v1616 = vld [vmem:[#allocation25 + $0x18] sm:$0xff]
    %v1617 = vpack.c.bf16 %v1607, %v1607
    %v1618 = vpack.c.bf16 %v1614, %v1613
    %v1619 = vpack.c.bf16 %v1616, %v1615
    %v1621 = vsel %vm484, %v1617, 0
    %1623 = vmatprep.subr.bf16.mxu0 0
    %1624 = vmatpush1.bf16.msra.mxu0 %v1618
    %1625 = vmatprep.subr.bf16.mxu0 0
    %1626 = vmatpush1.bf16.msra.mxu0 %v1619
    %1627 = vmatprep.subr.bf16.mxu0 0
    %1628 = vmatpush1.bf16.msra.mxu0 0
    %1629 = vmatprep.subr.bf16.mxu0 0
    %1630 = vmatpush1.bf16.msra.mxu0 0
    %1631 = vmatprep.subr.bf16.mxu0 0
    %1632 = vmatpush1.bf16.msra.mxu0 0
    %1633 = vmatprep.subr.bf16.mxu0 0
    %1634 = vmatpush1.bf16.msra.mxu0 0
    %1635 = vmatprep.subr.bf16.mxu0 0
    %1636 = vmatpush1.bf16.msra.mxu0 0
    %1637 = vmatprep.subr.bf16.mxu0 0
    %1638 = vmatpush1.bf16.msra.mxu0 0
    %1639 = vmatprep.subr.bf16.mxu0 0
    %1640 = vmatpush1.bf16.msra.mxu0 0
    %1641 = vmatprep.subr.bf16.mxu0 0
    %1642 = vmatpush1.bf16.msra.mxu0 0
    %1643 = vmatprep.subr.bf16.mxu0 0
    %1644 = vmatpush1.bf16.msra.mxu0 0
    %1645 = vmatprep.subr.bf16.mxu0 0
    %1646 = vmatpush1.bf16.msra.mxu0 0
    %1647 = vmatprep.subr.bf16.mxu0 0
    %1648 = vmatpush1.bf16.msra.mxu0 0
    %1649 = vmatprep.subr.bf16.mxu0 0
    %1650 = vmatpush1.bf16.msra.mxu0 0
    %1651 = vmatprep.subr.bf16.mxu0 0
    %1652 = vmatpush1.bf16.msra.mxu0 0
    %1653 = vmatprep.subr.bf16.mxu0 0
    %1654 = vmatpush1.bf16.msra.mxu0 0
    %1655 = vmatprep.mubr.bf16.mxu0 0
    %1656 = vmatmul.mubr.bf16.gmra.mrb[0].mxu0 %v1621
    %v1657 = vpop.f32.mrb[0].mxu0
    %v1658 = vadd.f32 0.0, %v1657
    %v1659 = vpop.f32.mrb[0].mxu0
    %v1660 = vpop.f32.mrb[0].mxu0
    %v1661 = vpop.f32.mrb[0].mxu0
    %1662 = vdwg.mxu0
    %1663 = vmatprep.subr.bf16.mxu0 0
    %1664 = vmatpush1.bf16.msra.mxu0 %v1612
    %1665 = vmatprep.subr.bf16.mxu0 0
    %1666 = vmatpush1.bf16.msra.mxu0 0
    %1667 = vmatprep.subr.bf16.mxu0 0
    %1668 = vmatpush1.bf16.msra.mxu0 0
    %1669 = vmatprep.subr.bf16.mxu0 0
    %1670 = vmatpush1.bf16.msra.mxu0 0
    %1671 = vmatprep.subr.bf16.mxu0 0
    %1672 = vmatpush1.bf16.msra.mxu0 0
    %1673 = vmatprep.subr.bf16.mxu0 0
    %1674 = vmatpush1.bf16.msra.mxu0 0
    %1675 = vmatprep.subr.bf16.mxu0 0
    %1676 = vmatpush1.bf16.msra.mxu0 0
    %1677 = vmatprep.subr.bf16.mxu0 0
    %1678 = vmatpush1.bf16.msra.mxu0 0
    %1679 = vmatprep.subr.bf16.mxu0 0
    %1680 = vmatpush1.bf16.msra.mxu0 0
    %1681 = vmatprep.subr.bf16.mxu0 0
    %1682 = vmatpush1.bf16.msra.mxu0 0
    %1683 = vmatprep.subr.bf16.mxu0 0
    %1684 = vmatpush1.bf16.msra.mxu0 0
    %1685 = vmatprep.subr.bf16.mxu0 0
    %1686 = vmatpush1.bf16.msra.mxu0 0
    %1687 = vmatprep.subr.bf16.mxu0 0
    %1688 = vmatpush1.bf16.msra.mxu0 0
    %1689 = vmatprep.subr.bf16.mxu0 0
    %1690 = vmatpush1.bf16.msra.mxu0 0
    %1691 = vmatprep.subr.bf16.mxu0 0
    %1692 = vmatpush1.bf16.msra.mxu0 0
    %1693 = vmatprep.subr.bf16.mxu0 0
    %1694 = vmatpush1.bf16.msra.mxu0 0
    %1695 = vmatprep.mubr.bf16.mxu0 0
    %1696 = vmatmul.mubr.bf16.gmra.mrb[0].mxu0 %v1305
    %v1697 = vpop.f32.mrb[0].mxu0
    %v1698 = vadd.f32 %v1658, %v1697
    %v1699 = vpop.f32.mrb[0].mxu0
    %v1700 = vpop.f32.mrb[0].mxu0
    %v1701 = vpop.f32.mrb[0].mxu0
    %1702 = vdwg.mxu0
    %v1703 = vld [vmem:[%s53] sm:$0x1]
    %v1705 = vlaneseq
    %v1706 = vshrl.u32 %v1705, 7
    %v1707 = vsub.s32 0, %v1706
    %v1708 = vrot.slane %v1703, %v1707
    %v1710 = vadd.f32 %v1698, %v1708
    %v1711 = vmax.f32 %v1710, 0.0
    %v1712 = vld [vmem:[#allocation27] sm:$0xff]
    %v1713 = vld [vmem:[#allocation27 + $0x8] sm:$0xff]
    %v1714 = vld [vmem:[#allocation27 + $0x10] sm:$0xff]
    %v1715 = vld [vmem:[#allocation27 + $0x18] sm:$0xff]
    %v1716 = vpack.c.bf16 %v1711, %v1711
    %v1717 = vpack.c.bf16 %v1713, %v1712
    %v1718 = vpack.c.bf16 %v1715, %v1714
    %v1719 = vld [vmem:[%s57] sm:$0x1]
    %v1721 = vlaneseq
    %v1722 = vshrl.u32 %v1721, 7
    %v1723 = vsub.s32 0, %v1722
    %v1724 = vrot.slane %v1719, %v1723
    %v1727 = vsel %vm484, %v1716, 0
    %1729 = vmatprep.subr.bf16.mxu0 0
    %1730 = vmatpush1.bf16.msra.mxu0 %v1717
    %1731 = vmatprep.subr.bf16.mxu0 0
    %1732 = vmatpush1.bf16.msra.mxu0 %v1718
    %1733 = vmatprep.subr.bf16.mxu0 0
    %1734 = vmatpush1.bf16.msra.mxu0 0
    %1735 = vmatprep.subr.bf16.mxu0 0
    %1736 = vmatpush1.bf16.msra.mxu0 0
    %1737 = vmatprep.subr.bf16.mxu0 0
    %1738 = vmatpush1.bf16.msra.mxu0 0
    %1739 = vmatprep.subr.bf16.mxu0 0
    %1740 = vmatpush1.bf16.msra.mxu0 0
    %1741 = vmatprep.subr.bf16.mxu0 0
    %1742 = vmatpush1.bf16.msra.mxu0 0
    %1743 = vmatprep.subr.bf16.mxu0 0
    %1744 = vmatpush1.bf16.msra.mxu0 0
    %1745 = vmatprep.subr.bf16.mxu0 0
    %1746 = vmatpush1.bf16.msra.mxu0 0
    %1747 = vmatprep.subr.bf16.mxu0 0
    %1748 = vmatpush1.bf16.msra.mxu0 0
    %1749 = vmatprep.subr.bf16.mxu0 0
    %1750 = vmatpush1.bf16.msra.mxu0 0
    %1751 = vmatprep.subr.bf16.mxu0 0
    %1752 = vmatpush1.bf16.msra.mxu0 0
    %1753 = vmatprep.subr.bf16.mxu0 0
    %1754 = vmatpush1.bf16.msra.mxu0 0
    %1755 = vmatprep.subr.bf16.mxu0 0
    %1756 = vmatpush1.bf16.msra.mxu0 0
    %1757 = vmatprep.subr.bf16.mxu0 0
    %1758 = vmatpush1.bf16.msra.mxu0 0
    %1759 = vmatprep.subr.bf16.mxu0 0
    %1760 = vmatpush1.bf16.msra.mxu0 0
    %1761 = vmatprep.mubr.bf16.mxu0 0
    %1762 = vmatmul.mubr.bf16.gmra.mrb[0].mxu0 %v1727
    %v1763 = vpop.f32.mrb[0].mxu0
    %v1764 = vadd.f32 %v1724, %v1763
    %v1765 = vpop.f32.mrb[0].mxu0
    %v1766 = vpop.f32.mrb[0].mxu0
    %v1767 = vpop.f32.mrb[0].mxu0
    %1768 = vdwg.mxu0
    %v1769 = vsel %vm1532, %v339, 0.0
    %1770 = vadd.xlane.f32.xlu0 %v1769
    %v1771 = vpop.xlane.xlu0 %1770
    %vm1772 = vcmp.gt.f32.partialorder %v1771, 0.5
    %v1773 = vsel %vm1772, 1, 0
    %vm1774 = vcmp.eq.s32.totalorder %v1773, 1
    %v1775 = vsel %vm1774, %v1764, -inf
    %1776 = vst [vmem:[%s59] sm:$0xff] %v1775
    // Predicated region
    $region186: #{fwd.1} parent=1 // pred_check
      _
    $region187: #{fwd.1} parent=1 // pred_check_branch
      %1778 = sbr.rel (0) target = $region189
    $region188: #{fwd.1} parent=1 // pred_region
      _
    $region189: #{fwd.1} parent=1 // pred_fallthru
      _
    // Predicated region
    $region190: #{fwd.1} parent=1 // pred_check
      _
    $region191: #{fwd.1} parent=1 // pred_check_branch
      %1780 = sbr.rel (0) target = $region193
    $region192: #{fwd.1} parent=1 // pred_region
      _
    $region193: #{fwd.1} parent=1 // pred_fallthru
      _
    %1781 = vsyncpa [#allocation3], 1
    %1782 = vsyncpa [#allocation5], 1
    %1783 = vsyncpa [#allocation8], 1
    %1784 = vsyncpa [#allocation11], 1
    %1785 = vsyncpa [#allocation14], 1
    %1786 = vsyncpa [#allocation17], 1
    %1787 = vsyncpa [#allocation20], 1
    %1788 = vsyncpa [#allocation23], 1
    %1789 = vsyncpa [#allocation26], 1

</llo_original>
